<compile_context>
chip_gen: v7x
topology: tpu7x:2x2x1
jax: 0.10.0
libtpu: 0.0.40
codegen_flags: <defaults>
</compile_context>

<pallas_src>
import functools

import jax
import jax.numpy as jnp
from jax import lax
from jax.experimental import pallas as pl
from jax.experimental.pallas import tpu as pltpu

EPS = 1e-5
LANE = 128


def _rup(c, m=LANE):
    return ((c + m - 1) // m) * m


def _fold_bn_into_conv(w, b, bn_rows):
    """Fold an inference-mode BN (after conv+bias) into the conv weights/bias."""
    gamma, beta, mean, var = bn_rows
    s = gamma * lax.rsqrt(var + EPS)
    return w * s, b * s + beta - mean * s      # broadcasts over out-channel axis


def _prepare_params(params, shall_downsample, mm_dtype):
    """Host-side BN folding + zero-padding of all channel dims to 128 multiples."""
    Cin, Cmid = params["w1"].shape
    Cout = params["w3"].shape[1]
    Cin_p, Cmid_p, Cout_p = _rup(Cin), _rup(Cmid), _rup(Cout)

    # BN1 as (scale, shift); padded channels get scale=shift=0 -> stay zero.
    g1, be1, m1, v1 = params["bn1"]
    s1 = g1 * lax.rsqrt(v1 + EPS)
    t1 = be1 - m1 * s1
    bn1p = (jnp.zeros((2, Cin_p), jnp.float32)
            .at[0, :Cin].set(s1).at[1, :Cin].set(t1))

    # conv1 with BN2 folded in; conv2 (3x3) with BN3 folded in.
    w1f, b1f = _fold_bn_into_conv(params["w1"], params["b1"][0], params["bn2"])
    w2f, b2f = _fold_bn_into_conv(params["w2"], params["b2"][0], params["bn3"])

    w1p = jnp.zeros((Cin_p, Cmid_p), jnp.float32).at[:Cin, :Cmid].set(w1f)
    if shall_downsample:
        wdp = jnp.zeros((Cin_p, Cout_p), jnp.float32).at[:Cin, :Cout].set(params["wd"])
        wa = jnp.concatenate([w1p, wdp], axis=1)          # (Cin_p, Cmid_p + Cout_p)
        ba = jnp.zeros((1, Cmid_p + Cout_p), jnp.float32).at[0, :Cmid].set(b1f)
    else:
        wa = w1p
        ba = jnp.zeros((1, Cmid_p), jnp.float32).at[0, :Cmid].set(b1f)

    w2p = (jnp.zeros((3, 3, Cmid_p, Cmid_p), jnp.float32)
           .at[:, :, :Cmid, :Cmid].set(w2f))
    w2flat = w2p.reshape(9 * Cmid_p, Cmid_p)              # tap-major: t = dy*3 + dx
    b2p = jnp.zeros((1, Cmid_p), jnp.float32).at[0, :Cmid].set(b2f)

    w3p = jnp.zeros((Cmid_p, Cout_p), jnp.float32).at[:Cmid, :Cout].set(params["w3"])
    b3p = jnp.zeros((1, Cout_p), jnp.float32).at[0, :Cout].set(params["b3"][0])

    return {
        "bn1": bn1p,
        "wa": wa.astype(mm_dtype), "ba": ba,
        "w2": w2flat.astype(mm_dtype), "b2": b2p,
        "w3": w3p.astype(mm_dtype), "b3": b3p,
        "dims": (Cin_p, Cmid_p, Cout_p),
    }


def _vmem_limit_bytes():
    """Explicit scoped-VMEM budget: <= 3/4 of physical, capped at 100 MiB
    (~48 MiB on v7x's 64 MiB, ~96-100 MiB on v5e/v6e's 128 MiB)."""
    try:
        cap = int(pltpu.get_tpu_info().vmem_capacity_bytes)
    except Exception:
        cap = 128 * 1024 * 1024
    return int(min(100 * 1024 * 1024, cap * 3 // 4))


def _pick_row_block(H2, W2, target_rows=512, max_rows=2048):
    """Smallest divisor of H2 giving >= target_rows matmul rows (v6e MXU fill),
    bounded by max_rows (VMEM); falls back to the largest block that fits."""
    divisors = [d for d in range(1, H2 + 1) if H2 % d == 0]
    fitting = [d for d in divisors if d * W2 <= max_rows]
    if not fitting:
        return 1
    for d in fitting:
        if d * W2 >= target_rows:
            return d
    return fitting[-1]


def _make_kernel(W2, Hb, Cmid_p, shall_downsample, mm_dtype):
    R2 = (Hb + 2) * W2        # rows per step incl. one halo row above and below
    M = Hb * W2               # output rows per step

    def kernel(x_ref, mask_ref, bn1_ref, wa_ref, ba_ref, w2_ref, b2_ref,
               w3_ref, b3_ref, out_ref):
        h_id = pl.program_id(1)
        r0 = pl.multiple_of(h_id * Hb, Hb)            # block start, H-padded coords
        Cin_p = x_ref.shape[-1]

        # ---- BN1 (pre-folded scale/shift) + ReLU, then ONE fused matmul for
        # body conv1 (BN2 folded) [+ downsample 1x1 conv]. ----------------------
        xblk = x_ref[pl.ds(r0, Hb + 2), :, :]         # (Hb+2, W2, Cin_p), with halo
        x2d = xblk.reshape(R2, Cin_p)
        hin = jnp.maximum(x2d * bn1_ref[0:1, :] + bn1_ref[1:2, :], 0.0)
        y = jnp.dot(hin.astype(mm_dtype), wa_ref[...],
                    preferred_element_type=jnp.float32) + ba_ref[...]

        a2d = jnp.maximum(y[:, :Cmid_p], 0.0)         # conv2 input, f32, (R2, Cmid_p)
        if shall_downsample:
            resid = y[W2:W2 + M, Cmid_p:]             # (M, Cout_p), interior rows only

        # Halo rows that fall outside the image must be exactly zero (conv2's
        # zero padding in H).  mask_ref[:,2]/[:,3] flag top/bottom halo rows;
        # the block position decides whether those rows are real image rows.
        top_keep = (h_id > 0).astype(jnp.float32)
        bot_keep = (h_id < pl.num_programs(1) - 1).astype(jnp.float32)
        row_keep = (1.0 - mask_ref[:, 2:3] * (1.0 - top_keep)
                        - mask_ref[:, 3:4] * (1.0 - bot_keep))
        a2d = a2d * row_keep

        # ---- 3x3 conv (stride 1, SAME pad, BN3 folded) as 9 accumulated per-tap
        # matmuls (K = Cmid_p each): no materialized (R, 9*Cmid) im2col and no
        # f32 padded scratch.  The +-1 column shifts are one-row shifts of the
        # flattened row axis plus a precomputed column-boundary mask
        # (mask_ref[:,0:2]); the H taps are plain row slices at multiples of W2.
        # TODO(synk): on v6e/v7x pairs of taps could be concatenated (K=2*Cmid_p)
        # to fill the 256-deep MXU; pltpu.roll(a2d, +-1, axis=0) is the XLU
        # alternative to the explicit one-row shift below.
        zrow = jnp.zeros((1, Cmid_p), jnp.float32)
        a_left = jnp.concatenate([zrow, a2d[:R2 - 1, :]], axis=0) * mask_ref[:, 0:1]
        a_right = jnp.concatenate([a2d[1:, :], zrow], axis=0) * mask_ref[:, 1:2]
        shifted = (a_left.astype(mm_dtype),    # reads column j-1
                   a2d.astype(mm_dtype),       # column j
                   a_right.astype(mm_dtype))   # column j+1

        acc = None
        for dy in range(3):
            for dx in range(3):
                lhs = shifted[dx][dy * W2:dy * W2 + M, :]
                t = dy * 3 + dx
                prod = jnp.dot(lhs, w2_ref[t * Cmid_p:(t + 1) * Cmid_p, :],
                               preferred_element_type=jnp.float32)
                acc = prod if acc is None else acc + prod
        c = jnp.maximum(acc + b2_ref[...], 0.0)       # (M, Cmid_p)

        # ---- body conv3 (1x1, bias) + residual add. ---------------------------
        o = jnp.dot(c.astype(mm_dtype), w3_ref[...],
                    preferred_element_type=jnp.float32) + b3_ref[...]
        if not shall_downsample:
            # Identity residual: re-read from x_ref just before the add so its
            # live range does not span the three matmuls (Cin_p == Cout_p).
            resid = x_ref[pl.ds(r0 + 1, Hb), :, :].reshape(M, Cin_p)
        out_ref[...] = (o + resid).reshape(Hb, W2, out_ref.shape[-1])

    return kernel


@functools.partial(jax.jit, static_argnames=("stride", "shall_downsample",
                                             "row_block", "matmul_dtype"))
def bottleneck_v2_forward(x_nchw, params, *, stride, shall_downsample,
                          row_block=None, matmul_dtype=jnp.bfloat16):
    """x_nchw: (N, Cin, H, W) float32.  Returns (N, Cout, H//s, W//s) float32."""
    s = stride
    x = jnp.transpose(x_nchw, (0, 2, 3, 1)).astype(jnp.float32)   # NHWC
    xs = x[:, ::s, ::s, :]   # BN/ReLU are elementwise and every consumer is a
                             # 1x1 stride-s conv -> only strided positions needed.
    N, H2, W2, Cin = xs.shape
    Cout = params["w3"].shape[1]
    if not shall_downsample:
        assert Cin == Cout, ("identity residual requires in_channels == "
                             f"out_channels, got {Cin} vs {Cout}")

    p = _prepare_params(params, shall_downsample, matmul_dtype)
    Cin_p, Cmid_p, Cout_p = p["dims"]
    Ca = Cmid_p + Cout_p if shall_downsample else Cmid_p

    Hb = row_block if row_block is not None else _pick_row_block(H2, W2)
    assert H2 % Hb == 0, f"row_block={Hb} must divide H_out={H2}"
    n_h = H2 // Hb
    R2 = (Hb + 2) * W2

    # Lane-dense channel pad + one zero halo row above/below; jit fuses this
    # with the transpose / stride into a single HBM pass.
    xs_p = jnp.pad(xs, ((0, 0), (1, 1), (0, 0), (0, Cin_p - Cin)))

    # Static 0/1 masks: col0=(j>=1), col1=(j<=W2-2) for the column shifts,
    # col2=top-halo row, col3=bottom-halo row.
    j = jnp.arange(R2, dtype=jnp.int32) % W2
    r = jnp.arange(R2, dtype=jnp.int32)
    masks = jnp.stack([(j >= 1), (j <= W2 - 2),
                       (r < W2), (r >= R2 - W2)], axis=1).astype(jnp.float32)

    kernel = _make_kernel(W2, Hb, Cmid_p, shall_downsample, matmul_dtype)

    out = pl.pallas_call(
        kernel,
        out_shape=jax.ShapeDtypeStruct((N, H2, W2, Cout_p), jnp.float32),
        grid_spec=pltpu.PrefetchScalarGridSpec(
            num_scalar_prefetch=0,
            grid=(N, n_h),   # h innermost -> x block stays resident per batch n
            in_specs=[
                pl.BlockSpec((None, H2 + 2, W2, Cin_p), lambda n, h: (n, 0, 0, 0)),
                pl.BlockSpec((R2, 4), lambda n, h: (0, 0)),
                pl.BlockSpec((2, Cin_p), lambda n, h: (0, 0)),
                pl.BlockSpec((Cin_p, Ca), lambda n, h: (0, 0)),
                pl.BlockSpec((1, Ca), lambda n, h: (0, 0)),
                pl.BlockSpec((9 * Cmid_p, Cmid_p), lambda n, h: (0, 0)),
                pl.BlockSpec((1, Cmid_p), lambda n, h: (0, 0)),
                pl.BlockSpec((Cmid_p, Cout_p), lambda n, h: (0, 0)),
                pl.BlockSpec((1, Cout_p), lambda n, h: (0, 0)),
                # TODO(synk): on v7x, pipeline_mode=pl.Buffered(1) on these
                # constant-index weight/bias specs would halve their VMEM (they
                # never change block index); left at the default for portability.
            ],
            out_specs=pl.BlockSpec((None, Hb, W2, Cout_p),
                                   lambda n, h: (n, h, 0, 0)),
        ),
        compiler_params=pltpu.CompilerParams(
            dimension_semantics=("parallel", "parallel"),
            vmem_limit_bytes=_vmem_limit_bytes()),
    )(xs_p, masks, p["bn1"], p["wa"], p["ba"], p["w2"], p["b2"], p["w3"], p["b3"])

    out = out[..., :Cout]                                  # drop channel padding
    return jnp.transpose(out, (0, 3, 1, 2))                # back to NCHW


# ----------------------------- pure-JAX reference -----------------------------
def _bn_relu_ref(v_nhwc, bn_rows):
    gamma, beta, mean, var = bn_rows[0], bn_rows[1], bn_rows[2], bn_rows[3]
    return jax.nn.relu((v_nhwc - mean) * lax.rsqrt(var + EPS) * gamma + beta)


def _conv_ref(x_nhwc, w_hwio, stride, padding):
    return lax.conv_general_dilated(
        x_nhwc, w_hwio, (stride, stride), padding,
        dimension_numbers=("NHWC", "HWIO", "NHWC"))


def bottleneck_v2_reference(x_nchw, params, *, stride, shall_downsample):
    Cin = x_nchw.shape[1]
    Cmid = params["w1"].shape[1]
    Cout = params["w3"].shape[1]
    x = jnp.transpose(x_nchw, (0, 2, 3, 1)).astype(jnp.float32)
    h = _bn_relu_ref(x, params["bn1"])
    if shall_downsample:
        residual = _conv_ref(h, params["wd"].reshape(1, 1, Cin, Cout), stride, "VALID")
    else:
        residual = x
    a = _conv_ref(h, params["w1"].reshape(1, 1, Cin, Cmid), stride, "VALID") + params["b1"][0]
    a = _bn_relu_ref(a, params["bn2"])
    c = _conv_ref(a, params["w2"], 1, "SAME") + params["b2"][0]
    c = _bn_relu_ref(c, params["bn3"])
    o = _conv_ref(c, params["w3"].reshape(1, 1, Cmid, Cout), 1, "VALID") + params["b3"][0]
    out = o + residual
    return jnp.transpose(out, (0, 3, 1, 2))


# ----------------------------- deterministic init -----------------------------
def _bn_init(key, C):
    kg, kb, km, kv = jax.random.split(key, 4)
    gamma = 1.0 + 0.1 * jax.random.normal(kg, (C,))
    beta = 0.1 * jax.random.normal(kb, (C,))
    mean = 0.1 * jax.random.normal(km, (C,))
    var = jax.random.uniform(kv, (C,), minval=0.5, maxval=1.5)
    return jnp.stack([gamma, beta, mean, var]).astype(jnp.float32)   # (4, C)


def init_params(key, Cin, Cout):
    Cmid = Cout // 4
    ks = jax.random.split(key, 10)
    return {
        "bn1": _bn_init(ks[0], Cin),
        "w1": (0.1 * jax.random.normal(ks[1], (Cin, Cmid))).astype(jnp.float32),
        "b1": (0.1 * jax.random.normal(ks[2], (1, Cmid))).astype(jnp.float32),
        "bn2": _bn_init(ks[3], Cmid),
        "w2": (0.1 * jax.random.normal(ks[4], (3, 3, Cmid, Cmid))).astype(jnp.float32),
        "b2": (0.1 * jax.random.normal(ks[5], (1, Cmid))).astype(jnp.float32),
        "bn3": _bn_init(ks[6], Cmid),
        "w3": (0.1 * jax.random.normal(ks[7], (Cmid, Cout))).astype(jnp.float32),
        "b3": (0.1 * jax.random.normal(ks[8], (1, Cout))).astype(jnp.float32),
        "wd": (0.1 * jax.random.normal(ks[9], (Cin, Cout))).astype(jnp.float32),
    }


if __name__ == "__main__":
    key = jax.random.PRNGKey(0)

    # --- case 1: BottleneckV2(8, 32, -1) -> downsample, stride 2 ---------------
    N, Cin, H, W = 2, 8, 16, 16
    Cout = 32
    stride = 2
    shall_downsample = True

    kx, kp, kx2, kp2 = jax.random.split(key, 4)
    x = jax.random.normal(kx, (N, Cin, H, W), dtype=jnp.float32)     # NCHW
    params = init_params(kp, Cin, Cout)
    ref = jax.block_until_ready(
        bottleneck_v2_reference(x, params, stride=stride,
                                shall_downsample=shall_downsample))

    # f32 MXU path, 2 row blocks per image (exercises the halo masking).
    out_f32 = jax.block_until_ready(
        bottleneck_v2_forward(x, params, stride=stride,
                              shall_downsample=shall_downsample,
                              row_block=4, matmul_dtype=jnp.float32))
    assert out_f32.shape == (N, Cout, H // stride, W // stride), out_f32.shape
    assert jnp.allclose(out_f32, ref, rtol=5e-4, atol=5e-4), \
        float(jnp.max(jnp.abs(out_f32 - ref)))

    # bf16 MXU operands, f32 accumulate (looser tolerance).
    out_bf16 = jax.block_until_ready(
        bottleneck_v2_forward(x, params, stride=stride,
                              shall_downsample=shall_downsample,
                              row_block=4, matmul_dtype=jnp.bfloat16))
    assert jnp.allclose(out_bf16, ref, rtol=5e-2, atol=5e-2), \
        float(jnp.max(jnp.abs(out_bf16 - ref)))

    # --- case 2: BottleneckV2(32, 32, 1) -> identity residual, stride 1 --------
    N2, C2, H2s, W2s = 2, 32, 8, 8
    x2 = jax.random.normal(kx2, (N2, C2, H2s, W2s), dtype=jnp.float32)
    params2 = init_params(kp2, C2, C2)
    ref2 = jax.block_until_ready(
        bottleneck_v2_reference(x2, params2, stride=1, shall_downsample=False))

    # default row_block (single block per image).
    out2 = jax.block_until_ready(
        bottleneck_v2_forward(x2, params2, stride=1, shall_downsample=False,
                              matmul_dtype=jnp.float32))
    assert out2.shape == (N2, C2, H2s, W2s), out2.shape
    assert jnp.allclose(out2, ref2, rtol=5e-4, atol=5e-4), \
        float(jnp.max(jnp.abs(out2 - ref2)))

    # explicit small row_block (4 row blocks per image, identity path).
    out2b = jax.block_until_ready(
        bottleneck_v2_forward(x2, params2, stride=1, shall_downsample=False,
                              row_block=2, matmul_dtype=jnp.float32))
    assert jnp.allclose(out2b, ref2, rtol=5e-4, atol=5e-4), \
        float(jnp.max(jnp.abs(out2b - ref2)))

    print("KERNEL_OK")
</pallas_src>

<mosaic_0001>
module attributes {stable_mosaic.version = 11 : i64} {
  func.func @kernel(%arg0: i32, %arg1: i32, %arg2: memref<1x10x8x128xf32, #tpu.memory_space<vmem>>, %arg3: memref<48x4xf32, #tpu.memory_space<vmem>>, %arg4: memref<2x128xf32, #tpu.memory_space<vmem>>, %arg5: memref<128x256xf32, #tpu.memory_space<vmem>>, %arg6: memref<1x256xf32, #tpu.memory_space<vmem>>, %arg7: memref<1152x128xf32, #tpu.memory_space<vmem>>, %arg8: memref<1x128xf32, #tpu.memory_space<vmem>>, %arg9: memref<128x128xf32, #tpu.memory_space<vmem>>, %arg10: memref<1x128xf32, #tpu.memory_space<vmem>>, %arg11: memref<1x4x8x128xf32, #tpu.memory_space<vmem>>) attributes {dimension_semantics = [#tpu.dimension_semantics<parallel>, #tpu.dimension_semantics<parallel>], iteration_bounds = array<i64: 2, 2>, scalar_prefetch = 0 : i64, scratch_operands = 0 : i64, tpu.core_type = #tpu.core_type<tc>, window_params = [{transform_indices = @transform_0, window_bounds = array<i64: 1, 10, 8, 128>}, {pipeline_mode = #tpu.pipeline_mode<synchronous>, transform_indices = @transform_1, window_bounds = array<i64: 48, 4>}, {pipeline_mode = #tpu.pipeline_mode<synchronous>, transform_indices = @transform_2, window_bounds = array<i64: 2, 128>}, {pipeline_mode = #tpu.pipeline_mode<synchronous>, transform_indices = @transform_3, window_bounds = array<i64: 128, 256>}, {pipeline_mode = #tpu.pipeline_mode<synchronous>, transform_indices = @transform_4, window_bounds = array<i64: 1, 256>}, {pipeline_mode = #tpu.pipeline_mode<synchronous>, transform_indices = @transform_5, window_bounds = array<i64: 1152, 128>}, {pipeline_mode = #tpu.pipeline_mode<synchronous>, transform_indices = @transform_6, window_bounds = array<i64: 1, 128>}, {pipeline_mode = #tpu.pipeline_mode<synchronous>, transform_indices = @transform_7, window_bounds = array<i64: 128, 128>}, {pipeline_mode = #tpu.pipeline_mode<synchronous>, transform_indices = @transform_8, window_bounds = array<i64: 1, 128>}, {transform_indices = @transform_9, window_bounds = array<i64: 1, 4, 8, 128>}]} {
    %c4_i32 = arith.constant 4 : i32
    %0 = arith.muli %arg1, %c4_i32 : i32
    %1 = tpu.assume_multiple %0, 4 : i32
    %c0 = arith.constant 0 : index
    %2 = arith.index_cast %1 : i32 to index
    %c0_0 = arith.constant 0 : index
    %c0_1 = arith.constant 0 : index
    %3 = vector.load %arg2[%c0, %2, %c0_0, %c0_1] : memref<1x10x8x128xf32, #tpu.memory_space<vmem>>, vector<1x6x8x128xf32>
    %4 = vector.shape_cast %3 : vector<1x6x8x128xf32> to vector<6x8x128xf32>
    %5 = vector.shape_cast %4 : vector<6x8x128xf32> to vector<48x128xf32>
    %c0_2 = arith.constant 0 : index
    %c0_3 = arith.constant 0 : index
    %6 = vector.load %arg4[%c0_2, %c0_3] : memref<2x128xf32, #tpu.memory_space<vmem>>, vector<1x128xf32>
    %7 = vector.broadcast %6 : vector<1x128xf32> to vector<48x128xf32>
    %8 = arith.mulf %5, %7 : vector<48x128xf32>
    %c1 = arith.constant 1 : index
    %c0_4 = arith.constant 0 : index
    %9 = vector.load %arg4[%c1, %c0_4] : memref<2x128xf32, #tpu.memory_space<vmem>>, vector<1x128xf32>
    %10 = vector.broadcast %9 : vector<1x128xf32> to vector<48x128xf32>
    %11 = arith.addf %8, %10 : vector<48x128xf32>
    %cst = arith.constant 0.000000e+00 : f32
    %12 = vector.broadcast %cst : f32 to vector<48x128xf32>
    %13 = arith.maximumf %11, %12 : vector<48x128xf32>
    %c0_5 = arith.constant 0 : index
    %c0_6 = arith.constant 0 : index
    %14 = vector.load %arg5[%c0_5, %c0_6] : memref<128x256xf32, #tpu.memory_space<vmem>>, vector<128x256xf32>
    %cst_7 = arith.constant dense<0.000000e+00> : vector<48x256xf32>
    %15 = tpu.matmul %13, %14, %cst_7 {dimension_numbers = #tpu.dot_dimension_numbers<[1], [0], [0], [1], [0, 0, 1, 1], [], []>} : vector<48x128xf32>, vector<128x256xf32>, vector<48x256xf32> -> vector<48x256xf32>
    %c0_8 = arith.constant 0 : index
    %c0_9 = arith.constant 0 : index
    %16 = vector.load %arg6[%c0_8, %c0_9] : memref<1x256xf32, #tpu.memory_space<vmem>>, vector<1x256xf32>
    %17 = vector.broadcast %16 : vector<1x256xf32> to vector<48x256xf32>
    %18 = arith.addf %15, %17 : vector<48x256xf32>
    %19 = vector.extract_strided_slice %18 {offsets = [0, 0], sizes = [48, 128], strides = [1, 1]} : vector<48x256xf32> to vector<48x128xf32>
    %cst_10 = arith.constant 0.000000e+00 : f32
    %20 = vector.broadcast %cst_10 : f32 to vector<48x128xf32>
    %21 = arith.maximumf %19, %20 : vector<48x128xf32>
    %22 = vector.extract_strided_slice %18 {offsets = [8, 128], sizes = [32, 128], strides = [1, 1]} : vector<48x256xf32> to vector<32x128xf32>
    %c0_i32 = arith.constant 0 : i32
    %23 = arith.cmpi sgt, %arg1, %c0_i32 : i32
    %24 = arith.extui %23 : i1 to i32
    %25 = arith.sitofp %24 : i32 to f32
    %c1_i32 = arith.constant 1 : i32
    %26 = arith.cmpi slt, %arg1, %c1_i32 : i32
    %27 = arith.extui %26 : i1 to i32
    %28 = arith.sitofp %27 : i32 to f32
    %c0_11 = arith.constant 0 : index
    %c2 = arith.constant 2 : index
    %29 = vector.load %arg3[%c0_11, %c2] : memref<48x4xf32, #tpu.memory_space<vmem>>, vector<48x1xf32>
    %cst_12 = arith.constant 1.000000e+00 : f32
    %30 = arith.subf %cst_12, %25 : f32
    %31 = vector.broadcast %30 : f32 to vector<48x1xf32>
    %32 = arith.mulf %29, %31 : vector<48x1xf32>
    %cst_13 = arith.constant 1.000000e+00 : f32
    %33 = vector.broadcast %cst_13 : f32 to vector<48x1xf32>
    %34 = arith.subf %33, %32 : vector<48x1xf32>
    %c0_14 = arith.constant 0 : index
    %c3 = arith.constant 3 : index
    %35 = vector.load %arg3[%c0_14, %c3] : memref<48x4xf32, #tpu.memory_space<vmem>>, vector<48x1xf32>
    %cst_15 = arith.constant 1.000000e+00 : f32
    %36 = arith.subf %cst_15, %28 : f32
    %37 = vector.broadcast %36 : f32 to vector<48x1xf32>
    %38 = arith.mulf %35, %37 : vector<48x1xf32>
    %39 = arith.subf %34, %38 : vector<48x1xf32>
    %40 = vector.broadcast %39 : vector<48x1xf32> to vector<48x128xf32>
    %41 = arith.mulf %21, %40 : vector<48x128xf32>
    %cst_16 = arith.constant 0.000000e+00 : f32
    %42 = vector.broadcast %cst_16 : f32 to vector<1x128xf32>
    %43 = vector.extract_strided_slice %41 {offsets = [0, 0], sizes = [47, 128], strides = [1, 1]} : vector<48x128xf32> to vector<47x128xf32>
    %44 = tpu.concatenate %42, %43 in 0 : vector<1x128xf32>, vector<47x128xf32> -> vector<48x128xf32>
    %c0_17 = arith.constant 0 : index
    %c0_18 = arith.constant 0 : index
    %45 = vector.load %arg3[%c0_17, %c0_18] : memref<48x4xf32, #tpu.memory_space<vmem>>, vector<48x1xf32>
    %46 = vector.broadcast %45 : vector<48x1xf32> to vector<48x128xf32>
    %47 = arith.mulf %44, %46 : vector<48x128xf32>
    %48 = vector.extract_strided_slice %41 {offsets = [1, 0], sizes = [47, 128], strides = [1, 1]} : vector<48x128xf32> to vector<47x128xf32>
    %49 = tpu.concatenate %48, %42 in 0 : vector<47x128xf32>, vector<1x128xf32> -> vector<48x128xf32>
    %c0_19 = arith.constant 0 : index
    %c1_20 = arith.constant 1 : index
    %50 = vector.load %arg3[%c0_19, %c1_20] : memref<48x4xf32, #tpu.memory_space<vmem>>, vector<48x1xf32>
    %51 = vector.broadcast %50 : vector<48x1xf32> to vector<48x128xf32>
    %52 = arith.mulf %49, %51 : vector<48x128xf32>
    %53 = vector.extract_strided_slice %47 {offsets = [0, 0], sizes = [32, 128], strides = [1, 1]} : vector<48x128xf32> to vector<32x128xf32>
    %c0_21 = arith.constant 0 : index
    %c0_22 = arith.constant 0 : index
    %54 = vector.load %arg7[%c0_21, %c0_22] : memref<1152x128xf32, #tpu.memory_space<vmem>>, vector<128x128xf32>
    %cst_23 = arith.constant dense<0.000000e+00> : vector<32x128xf32>
    %55 = tpu.matmul %53, %54, %cst_23 {dimension_numbers = #tpu.dot_dimension_numbers<[1], [0], [0], [1], [0, 0, 1, 1], [], []>} : vector<32x128xf32>, vector<128x128xf32>, vector<32x128xf32> -> vector<32x128xf32>
    %56 = vector.extract_strided_slice %41 {offsets = [0, 0], sizes = [32, 128], strides = [1, 1]} : vector<48x128xf32> to vector<32x128xf32>
    %c128 = arith.constant 128 : index
    %c0_24 = arith.constant 0 : index
    %57 = vector.load %arg7[%c128, %c0_24] : memref<1152x128xf32, #tpu.memory_space<vmem>>, vector<128x128xf32>
    %cst_25 = arith.constant dense<0.000000e+00> : vector<32x128xf32>
    %58 = tpu.matmul %56, %57, %cst_25 {dimension_numbers = #tpu.dot_dimension_numbers<[1], [0], [0], [1], [0, 0, 1, 1], [], []>} : vector<32x128xf32>, vector<128x128xf32>, vector<32x128xf32> -> vector<32x128xf32>
    %59 = arith.addf %55, %58 : vector<32x128xf32>
    %60 = vector.extract_strided_slice %52 {offsets = [0, 0], sizes = [32, 128], strides = [1, 1]} : vector<48x128xf32> to vector<32x128xf32>
    %c256 = arith.constant 256 : index
    %c0_26 = arith.constant 0 : index
    %61 = vector.load %arg7[%c256, %c0_26] : memref<1152x128xf32, #tpu.memory_space<vmem>>, vector<128x128xf32>
    %cst_27 = arith.constant dense<0.000000e+00> : vector<32x128xf32>
    %62 = tpu.matmul %60, %61, %cst_27 {dimension_numbers = #tpu.dot_dimension_numbers<[1], [0], [0], [1], [0, 0, 1, 1], [], []>} : vector<32x128xf32>, vector<128x128xf32>, vector<32x128xf32> -> vector<32x128xf32>
    %63 = arith.addf %59, %62 : vector<32x128xf32>
    %64 = vector.extract_strided_slice %47 {offsets = [8, 0], sizes = [32, 128], strides = [1, 1]} : vector<48x128xf32> to vector<32x128xf32>
    %c384 = arith.constant 384 : index
    %c0_28 = arith.constant 0 : index
    %65 = vector.load %arg7[%c384, %c0_28] : memref<1152x128xf32, #tpu.memory_space<vmem>>, vector<128x128xf32>
    %cst_29 = arith.constant dense<0.000000e+00> : vector<32x128xf32>
    %66 = tpu.matmul %64, %65, %cst_29 {dimension_numbers = #tpu.dot_dimension_numbers<[1], [0], [0], [1], [0, 0, 1, 1], [], []>} : vector<32x128xf32>, vector<128x128xf32>, vector<32x128xf32> -> vector<32x128xf32>
    %67 = arith.addf %63, %66 : vector<32x128xf32>
    %68 = vector.extract_strided_slice %41 {offsets = [8, 0], sizes = [32, 128], strides = [1, 1]} : vector<48x128xf32> to vector<32x128xf32>
    %c512 = arith.constant 512 : index
    %c0_30 = arith.constant 0 : index
    %69 = vector.load %arg7[%c512, %c0_30] : memref<1152x128xf32, #tpu.memory_space<vmem>>, vector<128x128xf32>
    %cst_31 = arith.constant dense<0.000000e+00> : vector<32x128xf32>
    %70 = tpu.matmul %68, %69, %cst_31 {dimension_numbers = #tpu.dot_dimension_numbers<[1], [0], [0], [1], [0, 0, 1, 1], [], []>} : vector<32x128xf32>, vector<128x128xf32>, vector<32x128xf32> -> vector<32x128xf32>
    %71 = arith.addf %67, %70 : vector<32x128xf32>
    %72 = vector.extract_strided_slice %52 {offsets = [8, 0], sizes = [32, 128], strides = [1, 1]} : vector<48x128xf32> to vector<32x128xf32>
    %c640 = arith.constant 640 : index
    %c0_32 = arith.constant 0 : index
    %73 = vector.load %arg7[%c640, %c0_32] : memref<1152x128xf32, #tpu.memory_space<vmem>>, vector<128x128xf32>
    %cst_33 = arith.constant dense<0.000000e+00> : vector<32x128xf32>
    %74 = tpu.matmul %72, %73, %cst_33 {dimension_numbers = #tpu.dot_dimension_numbers<[1], [0], [0], [1], [0, 0, 1, 1], [], []>} : vector<32x128xf32>, vector<128x128xf32>, vector<32x128xf32> -> vector<32x128xf32>
    %75 = arith.addf %71, %74 : vector<32x128xf32>
    %76 = vector.extract_strided_slice %47 {offsets = [16, 0], sizes = [32, 128], strides = [1, 1]} : vector<48x128xf32> to vector<32x128xf32>
    %c768 = arith.constant 768 : index
    %c0_34 = arith.constant 0 : index
    %77 = vector.load %arg7[%c768, %c0_34] : memref<1152x128xf32, #tpu.memory_space<vmem>>, vector<128x128xf32>
    %cst_35 = arith.constant dense<0.000000e+00> : vector<32x128xf32>
    %78 = tpu.matmul %76, %77, %cst_35 {dimension_numbers = #tpu.dot_dimension_numbers<[1], [0], [0], [1], [0, 0, 1, 1], [], []>} : vector<32x128xf32>, vector<128x128xf32>, vector<32x128xf32> -> vector<32x128xf32>
    %79 = arith.addf %75, %78 : vector<32x128xf32>
    %80 = vector.extract_strided_slice %41 {offsets = [16, 0], sizes = [32, 128], strides = [1, 1]} : vector<48x128xf32> to vector<32x128xf32>
    %c896 = arith.constant 896 : index
    %c0_36 = arith.constant 0 : index
    %81 = vector.load %arg7[%c896, %c0_36] : memref<1152x128xf32, #tpu.memory_space<vmem>>, vector<128x128xf32>
    %cst_37 = arith.constant dense<0.000000e+00> : vector<32x128xf32>
    %82 = tpu.matmul %80, %81, %cst_37 {dimension_numbers = #tpu.dot_dimension_numbers<[1], [0], [0], [1], [0, 0, 1, 1], [], []>} : vector<32x128xf32>, vector<128x128xf32>, vector<32x128xf32> -> vector<32x128xf32>
    %83 = arith.addf %79, %82 : vector<32x128xf32>
    %84 = vector.extract_strided_slice %52 {offsets = [16, 0], sizes = [32, 128], strides = [1, 1]} : vector<48x128xf32> to vector<32x128xf32>
    %c1024 = arith.constant 1024 : index
    %c0_38 = arith.constant 0 : index
    %85 = vector.load %arg7[%c1024, %c0_38] : memref<1152x128xf32, #tpu.memory_space<vmem>>, vector<128x128xf32>
    %cst_39 = arith.constant dense<0.000000e+00> : vector<32x128xf32>
    %86 = tpu.matmul %84, %85, %cst_39 {dimension_numbers = #tpu.dot_dimension_numbers<[1], [0], [0], [1], [0, 0, 1, 1], [], []>} : vector<32x128xf32>, vector<128x128xf32>, vector<32x128xf32> -> vector<32x128xf32>
    %87 = arith.addf %83, %86 : vector<32x128xf32>
    %c0_40 = arith.constant 0 : index
    %c0_41 = arith.constant 0 : index
    %88 = vector.load %arg8[%c0_40, %c0_41] : memref<1x128xf32, #tpu.memory_space<vmem>>, vector<1x128xf32>
    %89 = vector.broadcast %88 : vector<1x128xf32> to vector<32x128xf32>
    %90 = arith.addf %87, %89 : vector<32x128xf32>
    %cst_42 = arith.constant 0.000000e+00 : f32
    %91 = vector.broadcast %cst_42 : f32 to vector<32x128xf32>
    %92 = arith.maximumf %90, %91 : vector<32x128xf32>
    %c0_43 = arith.constant 0 : index
    %c0_44 = arith.constant 0 : index
    %93 = vector.load %arg9[%c0_43, %c0_44] : memref<128x128xf32, #tpu.memory_space<vmem>>, vector<128x128xf32>
    %cst_45 = arith.constant dense<0.000000e+00> : vector<32x128xf32>
    %94 = tpu.matmul %92, %93, %cst_45 {dimension_numbers = #tpu.dot_dimension_numbers<[1], [0], [0], [1], [0, 0, 1, 1], [], []>} : vector<32x128xf32>, vector<128x128xf32>, vector<32x128xf32> -> vector<32x128xf32>
    %c0_46 = arith.constant 0 : index
    %c0_47 = arith.constant 0 : index
    %95 = vector.load %arg10[%c0_46, %c0_47] : memref<1x128xf32, #tpu.memory_space<vmem>>, vector<1x128xf32>
    %96 = vector.broadcast %95 : vector<1x128xf32> to vector<32x128xf32>
    %97 = arith.addf %94, %96 : vector<32x128xf32>
    %98 = arith.addf %97, %22 : vector<32x128xf32>
    %99 = vector.shape_cast %98 : vector<32x128xf32> to vector<4x8x128xf32>
    %c0_48 = arith.constant 0 : index
    %c0_49 = arith.constant 0 : index
    %c0_50 = arith.constant 0 : index
    %c0_51 = arith.constant 0 : index
    %100 = vector.load %arg11[%c0_48, %c0_49, %c0_50, %c0_51] : memref<1x4x8x128xf32, #tpu.memory_space<vmem>>, vector<1x4x8x128xf32>
    %101 = vector.shape_cast %100 : vector<1x4x8x128xf32> to vector<4x8x128xf32>
    %102 = vector.shape_cast %99 : vector<4x8x128xf32> to vector<1x4x8x128xf32>
    tpu.vector_store %arg11[%c0_48, %c0_49, %c0_50, %c0_51], %102 {strides = array<i32>} : memref<1x4x8x128xf32, #tpu.memory_space<vmem>>, vector<1x4x8x128xf32>,
    return
  }
  func.func @transform_0(%arg0: i32, %arg1: i32) -> (i32, i32, i32, i32) {
    %c0_i32 = arith.constant 0 : i32
    %c0_i32_0 = arith.constant 0 : i32
    %c0_i32_1 = arith.constant 0 : i32
    %c0_i32_2 = arith.constant 0 : i32
    return %arg0, %c0_i32, %c0_i32_0, %c0_i32_1 : i32, i32, i32, i32
  }
  func.func @transform_1(%arg0: i32, %arg1: i32) -> (i32, i32) {
    %c0_i32 = arith.constant 0 : i32
    %c0_i32_0 = arith.constant 0 : i32
    %c0_i32_1 = arith.constant 0 : i32
    return %c0_i32, %c0_i32_0 : i32, i32
  }
  func.func @transform_2(%arg0: i32, %arg1: i32) -> (i32, i32) {
    %c0_i32 = arith.constant 0 : i32
    %c0_i32_0 = arith.constant 0 : i32
    %c0_i32_1 = arith.constant 0 : i32
    return %c0_i32, %c0_i32_0 : i32, i32
  }
  func.func @transform_3(%arg0: i32, %arg1: i32) -> (i32, i32) {
    %c0_i32 = arith.constant 0 : i32
    %c0_i32_0 = arith.constant 0 : i32
    %c0_i32_1 = arith.constant 0 : i32
    return %c0_i32, %c0_i32_0 : i32, i32
  }
  func.func @transform_4(%arg0: i32, %arg1: i32) -> (i32, i32) {
    %c0_i32 = arith.constant 0 : i32
    %c0_i32_0 = arith.constant 0 : i32
    %c0_i32_1 = arith.constant 0 : i32
    return %c0_i32, %c0_i32_0 : i32, i32
  }
  func.func @transform_5(%arg0: i32, %arg1: i32) -> (i32, i32) {
    %c0_i32 = arith.constant 0 : i32
    %c0_i32_0 = arith.constant 0 : i32
    %c0_i32_1 = arith.constant 0 : i32
    return %c0_i32, %c0_i32_0 : i32, i32
  }
  func.func @transform_6(%arg0: i32, %arg1: i32) -> (i32, i32) {
    %c0_i32 = arith.constant 0 : i32
    %c0_i32_0 = arith.constant 0 : i32
    %c0_i32_1 = arith.constant 0 : i32
    return %c0_i32, %c0_i32_0 : i32, i32
  }
  func.func @transform_7(%arg0: i32, %arg1: i32) -> (i32, i32) {
    %c0_i32 = arith.constant 0 : i32
    %c0_i32_0 = arith.constant 0 : i32
    %c0_i32_1 = arith.constant 0 : i32
    return %c0_i32, %c0_i32_0 : i32, i32
  }
  func.func @transform_8(%arg0: i32, %arg1: i32) -> (i32, i32) {
    %c0_i32 = arith.constant 0 : i32
    %c0_i32_0 = arith.constant 0 : i32
    %c0_i32_1 = arith.constant 0 : i32
    return %c0_i32, %c0_i32_0 : i32, i32
  }
  func.func @transform_9(%arg0: i32, %arg1: i32) -> (i32, i32, i32, i32) {
    %c0_i32 = arith.constant 0 : i32
    %c0_i32_0 = arith.constant 0 : i32
    %c0_i32_1 = arith.constant 0 : i32
    return %arg0, %arg1, %c0_i32, %c0_i32_0 : i32, i32, i32, i32
  }
}

</mosaic_0001>

<llo_original>
// kernel: bottleneck_v2_forward.1
$region0: #{bottleneck_v2_forward.1}
  #allocation0 [shape = 'u32[]', space=smem, size = 0x4, offset = 0x4, fixed_abs, tag = 'smem constant byte address 0x4 - core index']
  #allocation1 [shape = 'u32[144,128]{1,0:T(1,128)}', space=vmem, size = 0x12000, scoped, tag = 'internal scratch']
  %s0 = inlined_call_operand.hbm [shape: f32[2,10,8,128], index: 0, kind: input, shape index: {}]
  %s1 = inlined_call_operand.hbm [shape: f32[48,4], index: 1, kind: input, shape index: {}]
  %s2 = inlined_call_operand.hbm [shape: f32[2,128], index: 2, kind: input, shape index: {}]
  %s3 = inlined_call_operand.hbm [shape: f32[128,256], index: 3, kind: input, shape index: {}]
  %s4 = inlined_call_operand.hbm [shape: f32[1,256], index: 4, kind: input, shape index: {}]
  %s5 = inlined_call_operand.hbm [shape: f32[1152,128], index: 5, kind: input, shape index: {}]
  %s6 = inlined_call_operand.hbm [shape: f32[1,128], index: 6, kind: input, shape index: {}]
  %s7 = inlined_call_operand.hbm [shape: f32[128,128], index: 7, kind: input, shape index: {}]
  %s8 = inlined_call_operand.hbm [shape: f32[1,128], index: 8, kind: input, shape index: {}]
  %s9 = inlined_call_operand.hbm [shape: f32[2,8,8,128], index: 9, kind: output, shape index: {}]
  %s10 = sld [smem:[#allocation0]]
  $region105: #{bottleneck_v2_forward.1} parent=0
    _
  %s12 = ssub.s32 1, %s10
  %s13 = scalar_select 0, %s12, %s10
  $region1: #{bottleneck_v2_forward.1} parent=0
    #allocation2 [shape = 'u8[81920]{0}', space=vmem, size = 0x14000, scoped, tag = 'input window, operand 0']
    #allocation3 [shape = 's32[2]{0}', space=sflag, size = 0x8, scoped, tag = 'scoped memory for bottleneck_v2_forward.1']
    #allocation4 [shape = 's32[2]{0}', space=sflag, size = 0x8, scoped, tag = 'scoped memory for bottleneck_v2_forward.1']
    #allocation5 [shape = 'u8[24576]{0}', space=vmem, size = 0x6000, scoped, tag = 'input window, operand 1, single buffered']
    #allocation6 [shape = 's32[1]{0}', space=sflag, size = 0x4, scoped, tag = 'scoped memory for bottleneck_v2_forward.1']
    #allocation7 [shape = 'u8[1024]{0}', space=vmem, size = 0x400, scoped, tag = 'input window, operand 2, single buffered']
    #allocation8 [shape = 'u8[131072]{0}', space=vmem, size = 0x20000, scoped, tag = 'input window, operand 3, single buffered']
    #allocation9 [shape = 's32[1]{0}', space=sflag, size = 0x4, scoped, tag = 'scoped memory for bottleneck_v2_forward.1']
    #allocation10 [shape = 'u8[1024]{0}', space=vmem, size = 0x400, scoped, tag = 'input window, operand 4, single buffered']
    #allocation11 [shape = 'u8[589824]{0}', space=vmem, size = 0x90000, scoped, tag = 'input window, operand 5, single buffered']
    #allocation12 [shape = 's32[1]{0}', space=sflag, size = 0x4, scoped, tag = 'scoped memory for bottleneck_v2_forward.1']
    #allocation13 [shape = 'u8[512]{0}', space=vmem, size = 0x400, scoped, tag = 'input window, operand 6, single buffered']
    #allocation14 [shape = 'u8[65536]{0}', space=vmem, size = 0x10000, scoped, tag = 'input window, operand 7, single buffered']
    #allocation15 [shape = 's32[1]{0}', space=sflag, size = 0x4, scoped, tag = 'scoped memory for bottleneck_v2_forward.1']
    #allocation16 [shape = 'u8[512]{0}', space=vmem, size = 0x400, scoped, tag = 'input window, operand 8, single buffered']
    #allocation17 [shape = 'u8[32768]{0}', space=vmem, size = 0x8000, scoped, tag = 'output window, operand 0']
    %14 = vsyncpa [#allocation3], 0
    %s15 = scalar_lea.sflag [#allocation3], 1
    %16 = vsyncpa %s15, 0
    %17 = vsyncpa [#allocation6], 0
    %18 = vsyncpa [#allocation9], 0
    %19 = vsyncpa [#allocation12], 0
    %20 = vsyncpa [#allocation15], 0
    %21 = vsyncpa [#allocation4], 0
    %s22 = scalar_lea.sflag [#allocation4], 1
    %23 = vsyncpa %s22, 0
    loop: start=0, step=1, limit=6
    $region2: #{bottleneck_v2_forward.1} parent=1 // loop_pre_header
      _
    $region3: #{bottleneck_v2_forward.1} parent=1 // loop_header
      %s25 = sphi 0, %s29
      %p26 = scmp.ge.s32.totalorder %s25, 6
      %s32 = sphi 0, %s44
      %s33 = sphi 0, %s40
      %s34 = sphi 0, %s32
      %s35 = sphi 0, %s33
      %s36 = sphi 0, %s34
      %s37 = sphi 0, %s35
      %s47 = sphi 0, %s49
      %s50 = sphi 0, %s47
      %s51 = sphi 0, %s50
      %s67 = sphi 0, %s51
      %s71 = sphi 0, %s71
      %s73 = sphi 0, %s71
      %s74 = sphi 0, %s73
      %s88 = sphi 0, %s74
      %s92 = sphi 0, %s92
      %s94 = sphi 0, %s92
      %s95 = sphi 0, %s94
      %s109 = sphi 0, %s95
      %s113 = sphi 0, %s113
      %s115 = sphi 0, %s113
      %s116 = sphi 0, %s115
      %s130 = sphi 0, %s116
      %s134 = sphi 0, %s134
      %s136 = sphi 0, %s134
      %s137 = sphi 0, %s136
      %s151 = sphi 0, %s137
      %s155 = sphi 0, %s155
      %s157 = sphi 0, %s155
      %s158 = sphi 0, %s157
      %s172 = sphi 0, %s158
      %s176 = sphi 0, %s176
      %s178 = sphi 0, %s176
      %s179 = sphi 0, %s178
      %s193 = sphi 0, %s179
      %s197 = sphi 0, %s197
      %s199 = sphi 0, %s197
      %s200 = sphi 0, %s199
      %s214 = sphi 0, %s200
      %s218 = sphi 0, %s218
      %s220 = sphi 0, %s218
      %s221 = sphi 0, %s220
      %s235 = sphi 0, %s221
      %s243 = sphi 0, %s245
      %s246 = sphi 0, %s243
      %s247 = sphi 0, %s246
      %s263 = sphi 0, %s247
    $region4: #{bottleneck_v2_forward.1} parent=1 // loop_header_branch
      %28 = sbr.rel (%p26) target = $region8
    $region5: #{bottleneck_v2_forward.1} parent=1 // loop_body
      %s30 = ssub.s32 %s25, 1
      %s31 = ssub.s32 %s25, 2
      %s38 = sadd.s32 1, %s33
      %p39 = scmp.ge.s32.totalorder %s38, 2
      %s40 = scalar_select %p39, 0, %s38
      %s41 = sadd.s32 1, %s32
      %s42 = scalar_select %p39, %s41, %s32
      %p43 = scmp.ge.s32.totalorder %s42, 2
      %s44 = scalar_select %p43, 0, %s42
      %s45 = ssub.s32 %s32, %s44
      %p46 = scmp.eq.s32.totalorder %s45, 0
      %s48 = sadd.s32 %s47, 1
      %s49 = scalar_select %p46, %s47, %s48
      %p52 = pneg %p46
      %p53 = scmp.eq.s32.totalorder %s25, 3
      %p54 = por %p52, %p53
      %p55 = scmp.ne.s32.totalorder %s47, %s50
      %p56 = scmp.eq.s32.totalorder %s25, 0
      %p57 = por %p55, %p56
      %p58 = scmp.ne.s32.totalorder %s47, %s50
      %p59 = scmp.eq.s32.totalorder %s30, 3
      %p60 = por %p58, %p59
      %p61 = scmp.ne.s32.totalorder %s50, %s51
      %p62 = scmp.eq.s32.totalorder %s30, 0
      %p63 = por %p61, %p62
      %p64 = scmp.ne.s32.totalorder %s50, %s51
      %p65 = scmp.eq.s32.totalorder %s31, 3
      %p66 = por %p64, %p65
      %p68 = scmp.ne.s32.totalorder %s51, %s67
      %p69 = scmp.eq.s32.totalorder %s31, 0
      %p70 = por %p68, %p69
      %s72 = sadd.s32 %s71, 1
      %p75 = scmp.eq.s32.totalorder %s25, 3
      %p76 = scmp.ne.s32.totalorder %s71, %s73
      %p77 = scmp.eq.s32.totalorder %s25, 0
      %p78 = por %p76, %p77
      %p79 = scmp.ne.s32.totalorder %s71, %s73
      %p80 = scmp.eq.s32.totalorder %s30, 3
      %p81 = por %p79, %p80
      %p82 = scmp.ne.s32.totalorder %s73, %s74
      %p83 = scmp.eq.s32.totalorder %s30, 0
      %p84 = por %p82, %p83
      %p85 = scmp.ne.s32.totalorder %s73, %s74
      %p86 = scmp.eq.s32.totalorder %s31, 3
      %p87 = por %p85, %p86
      %p89 = scmp.ne.s32.totalorder %s74, %s88
      %p90 = scmp.eq.s32.totalorder %s31, 0
      %p91 = por %p89, %p90
      %s93 = sadd.s32 %s92, 1
      %p96 = scmp.eq.s32.totalorder %s25, 3
      %p97 = scmp.ne.s32.totalorder %s92, %s94
      %p98 = scmp.eq.s32.totalorder %s25, 0
      %p99 = por %p97, %p98
      %p100 = scmp.ne.s32.totalorder %s92, %s94
      %p101 = scmp.eq.s32.totalorder %s30, 3
      %p102 = por %p100, %p101
      %p103 = scmp.ne.s32.totalorder %s94, %s95
      %p104 = scmp.eq.s32.totalorder %s30, 0
      %p105 = por %p103, %p104
      %p106 = scmp.ne.s32.totalorder %s94, %s95
      %p107 = scmp.eq.s32.totalorder %s31, 3
      %p108 = por %p106, %p107
      %p110 = scmp.ne.s32.totalorder %s95, %s109
      %p111 = scmp.eq.s32.totalorder %s31, 0
      %p112 = por %p110, %p111
      %s114 = sadd.s32 %s113, 1
      %p117 = scmp.eq.s32.totalorder %s25, 3
      %p118 = scmp.ne.s32.totalorder %s113, %s115
      %p119 = scmp.eq.s32.totalorder %s25, 0
      %p120 = por %p118, %p119
      %p121 = scmp.ne.s32.totalorder %s113, %s115
      %p122 = scmp.eq.s32.totalorder %s30, 3
      %p123 = por %p121, %p122
      %p124 = scmp.ne.s32.totalorder %s115, %s116
      %p125 = scmp.eq.s32.totalorder %s30, 0
      %p126 = por %p124, %p125
      %p127 = scmp.ne.s32.totalorder %s115, %s116
      %p128 = scmp.eq.s32.totalorder %s31, 3
      %p129 = por %p127, %p128
      %p131 = scmp.ne.s32.totalorder %s116, %s130
      %p132 = scmp.eq.s32.totalorder %s31, 0
      %p133 = por %p131, %p132
      %s135 = sadd.s32 %s134, 1
      %p138 = scmp.eq.s32.totalorder %s25, 3
      %p139 = scmp.ne.s32.totalorder %s134, %s136
      %p140 = scmp.eq.s32.totalorder %s25, 0
      %p141 = por %p139, %p140
      %p142 = scmp.ne.s32.totalorder %s134, %s136
      %p143 = scmp.eq.s32.totalorder %s30, 3
      %p144 = por %p142, %p143
      %p145 = scmp.ne.s32.totalorder %s136, %s137
      %p146 = scmp.eq.s32.totalorder %s30, 0
      %p147 = por %p145, %p146
      %p148 = scmp.ne.s32.totalorder %s136, %s137
      %p149 = scmp.eq.s32.totalorder %s31, 3
      %p150 = por %p148, %p149
      %p152 = scmp.ne.s32.totalorder %s137, %s151
      %p153 = scmp.eq.s32.totalorder %s31, 0
      %p154 = por %p152, %p153
      %s156 = sadd.s32 %s155, 1
      %p159 = scmp.eq.s32.totalorder %s25, 3
      %p160 = scmp.ne.s32.totalorder %s155, %s157
      %p161 = scmp.eq.s32.totalorder %s25, 0
      %p162 = por %p160, %p161
      %p163 = scmp.ne.s32.totalorder %s155, %s157
      %p164 = scmp.eq.s32.totalorder %s30, 3
      %p165 = por %p163, %p164
      %p166 = scmp.ne.s32.totalorder %s157, %s158
      %p167 = scmp.eq.s32.totalorder %s30, 0
      %p168 = por %p166, %p167
      %p169 = scmp.ne.s32.totalorder %s157, %s158
      %p170 = scmp.eq.s32.totalorder %s31, 3
      %p171 = por %p169, %p170
      %p173 = scmp.ne.s32.totalorder %s158, %s172
      %p174 = scmp.eq.s32.totalorder %s31, 0
      %p175 = por %p173, %p174
      %s177 = sadd.s32 %s176, 1
      %p180 = scmp.eq.s32.totalorder %s25, 3
      %p181 = scmp.ne.s32.totalorder %s176, %s178
      %p182 = scmp.eq.s32.totalorder %s25, 0
      %p183 = por %p181, %p182
      %p184 = scmp.ne.s32.totalorder %s176, %s178
      %p185 = scmp.eq.s32.totalorder %s30, 3
      %p186 = por %p184, %p185
      %p187 = scmp.ne.s32.totalorder %s178, %s179
      %p188 = scmp.eq.s32.totalorder %s30, 0
      %p189 = por %p187, %p188
      %p190 = scmp.ne.s32.totalorder %s178, %s179
      %p191 = scmp.eq.s32.totalorder %s31, 3
      %p192 = por %p190, %p191
      %p194 = scmp.ne.s32.totalorder %s179, %s193
      %p195 = scmp.eq.s32.totalorder %s31, 0
      %p196 = por %p194, %p195
      %s198 = sadd.s32 %s197, 1
      %p201 = scmp.eq.s32.totalorder %s25, 3
      %p202 = scmp.ne.s32.totalorder %s197, %s199
      %p203 = scmp.eq.s32.totalorder %s25, 0
      %p204 = por %p202, %p203
      %p205 = scmp.ne.s32.totalorder %s197, %s199
      %p206 = scmp.eq.s32.totalorder %s30, 3
      %p207 = por %p205, %p206
      %p208 = scmp.ne.s32.totalorder %s199, %s200
      %p209 = scmp.eq.s32.totalorder %s30, 0
      %p210 = por %p208, %p209
      %p211 = scmp.ne.s32.totalorder %s199, %s200
      %p212 = scmp.eq.s32.totalorder %s31, 3
      %p213 = por %p211, %p212
      %p215 = scmp.ne.s32.totalorder %s200, %s214
      %p216 = scmp.eq.s32.totalorder %s31, 0
      %p217 = por %p215, %p216
      %s219 = sadd.s32 %s218, 1
      %p222 = scmp.eq.s32.totalorder %s25, 3
      %p223 = scmp.ne.s32.totalorder %s218, %s220
      %p224 = scmp.eq.s32.totalorder %s25, 0
      %p225 = por %p223, %p224
      %p226 = scmp.ne.s32.totalorder %s218, %s220
      %p227 = scmp.eq.s32.totalorder %s30, 3
      %p228 = por %p226, %p227
      %p229 = scmp.ne.s32.totalorder %s220, %s221
      %p230 = scmp.eq.s32.totalorder %s30, 0
      %p231 = por %p229, %p230
      %p232 = scmp.ne.s32.totalorder %s220, %s221
      %p233 = scmp.eq.s32.totalorder %s31, 3
      %p234 = por %p232, %p233
      %p236 = scmp.ne.s32.totalorder %s221, %s235
      %p237 = scmp.eq.s32.totalorder %s31, 0
      %p238 = por %p236, %p237
      %s239 = ssub.s32 %s32, %s44
      %s240 = ssub.s32 %s33, %s40
      %s241 = sor.u32 %s239, %s240
      %p242 = scmp.eq.s32.totalorder %s241, 0
      %s244 = sadd.s32 %s243, 1
      %s245 = scalar_select %p242, %s243, %s244
      %p248 = pneg %p242
      %p249 = scmp.eq.s32.totalorder %s25, 3
      %p250 = por %p248, %p249
      %p251 = scmp.ne.s32.totalorder %s243, %s246
      %p252 = scmp.eq.s32.totalorder %s25, 0
      %p253 = por %p251, %p252
      %p254 = scmp.ne.s32.totalorder %s243, %s246
      %p255 = scmp.eq.s32.totalorder %s30, 3
      %p256 = por %p254, %p255
      %p257 = scmp.ne.s32.totalorder %s246, %s247
      %p258 = scmp.eq.s32.totalorder %s30, 0
      %p259 = por %p257, %p258
      %p260 = scmp.ne.s32.totalorder %s246, %s247
      %p261 = scmp.eq.s32.totalorder %s31, 3
      %p262 = por %p260, %p261
      %p264 = scmp.ne.s32.totalorder %s247, %s263
      %p265 = scmp.eq.s32.totalorder %s31, 0
      %p266 = por %p264, %p265
      %p267 = scmp.le.s32.totalorder 1, %s25
      %p268 = scmp.lt.s32.totalorder %s25, 5
      %p269 = pnand %p267, %p268
      %p270 = pneg %p269
      // Predicated region
      $region9: #{bottleneck_v2_forward.1} parent=5 // pred_check
        _
      $region10: #{bottleneck_v2_forward.1} parent=5 // pred_check_branch
        %272 = sbr.rel (%p269) target = $region12
      $region11: #{bottleneck_v2_forward.1} parent=5 // pred_region
        %s273 = ssub.s32 %s25, 1
        // Predicated region
        $region13: #{bottleneck_v2_forward.1} parent=11 // pred_check
          %p274 = pneg %p84
        $region14: #{bottleneck_v2_forward.1} parent=11 // pred_check_branch
          %276 = sbr.rel (%p274) target = $region16
        $region15: #{bottleneck_v2_forward.1} parent=11 // pred_region
          %s278 = ssub.s32 768, 768
          %279 = vsyncadd [#allocation6], %s278
          %s280 = sshll.u32 [#allocation5], 4
          %s281 = int_to_ptr.vmem [resolvable:$true] %s280
          %286 = dma.hbm_to_vmem [thread:$0]  %s1, 768, %s281, [#allocation6], 128, 128, 8
        $region16: #{bottleneck_v2_forward.1} parent=11 // pred_fallthru
          _
        // Predicated region
        $region17: #{bottleneck_v2_forward.1} parent=11 // pred_check
          %p287 = pneg %p105
        $region18: #{bottleneck_v2_forward.1} parent=11 // pred_check_branch
          %289 = sbr.rel (%p287) target = $region20
        $region19: #{bottleneck_v2_forward.1} parent=11 // pred_region
          %s291 = ssub.s32 32, 32
          %292 = vsyncadd [#allocation6], %s291
          %s294 = sshll.u32 [#allocation7], 4
          %s295 = int_to_ptr.vmem [resolvable:$true] %s294
          %297 = dma.hbm_to_vmem [thread:$0]  %s2, 32, %s295, [#allocation6]
        $region20: #{bottleneck_v2_forward.1} parent=11 // pred_fallthru
          _
        // Predicated region
        $region21: #{bottleneck_v2_forward.1} parent=11 // pred_check
          %p298 = pneg %p126
        $region22: #{bottleneck_v2_forward.1} parent=11 // pred_check_branch
          %300 = sbr.rel (%p298) target = $region24
        $region23: #{bottleneck_v2_forward.1} parent=11 // pred_region
          %s302 = ssub.s32 4096, 4096
          %303 = vsyncadd [#allocation9], %s302
          %s304 = sshll.u32 [#allocation8], 4
          %s305 = int_to_ptr.vmem [resolvable:$true] %s304
          %310 = dma.hbm_to_vmem [thread:$0]  %s3, 4096, %s305, [#allocation9], 256, 256, 16
        $region24: #{bottleneck_v2_forward.1} parent=11 // pred_fallthru
          _
        // Predicated region
        $region25: #{bottleneck_v2_forward.1} parent=11 // pred_check
          %p311 = pneg %p147
        $region26: #{bottleneck_v2_forward.1} parent=11 // pred_check_branch
          %313 = sbr.rel (%p311) target = $region28
        $region27: #{bottleneck_v2_forward.1} parent=11 // pred_region
          %s315 = ssub.s32 32, 32
          %316 = vsyncadd [#allocation9], %s315
          %s318 = sshll.u32 [#allocation10], 4
          %s319 = int_to_ptr.vmem [resolvable:$true] %s318
          %321 = dma.hbm_to_vmem [thread:$0]  %s4, 32, %s319, [#allocation9]
        $region28: #{bottleneck_v2_forward.1} parent=11 // pred_fallthru
          _
        // Predicated region
        $region29: #{bottleneck_v2_forward.1} parent=11 // pred_check
          %p322 = pneg %p168
        $region30: #{bottleneck_v2_forward.1} parent=11 // pred_check_branch
          %324 = sbr.rel (%p322) target = $region32
        $region31: #{bottleneck_v2_forward.1} parent=11 // pred_region
          %s326 = ssub.s32 18432, 18432
          %327 = vsyncadd [#allocation12], %s326
          %s328 = sshll.u32 [#allocation11], 4
          %s329 = int_to_ptr.vmem [resolvable:$true] %s328
          %334 = dma.hbm_to_vmem [thread:$0]  %s5, 18432, %s329, [#allocation12], 128, 128, 8
        $region32: #{bottleneck_v2_forward.1} parent=11 // pred_fallthru
          _
        // Predicated region
        $region33: #{bottleneck_v2_forward.1} parent=11 // pred_check
          %p335 = pneg %p189
        $region34: #{bottleneck_v2_forward.1} parent=11 // pred_check_branch
          %337 = sbr.rel (%p335) target = $region36
        $region35: #{bottleneck_v2_forward.1} parent=11 // pred_region
          %s339 = ssub.s32 16, 16
          %340 = vsyncadd [#allocation12], %s339
          %s342 = sshll.u32 [#allocation13], 4
          %s343 = int_to_ptr.vmem [resolvable:$true] %s342
          %345 = dma.hbm_to_vmem [thread:$0]  %s6, 16, %s343, [#allocation12]
        $region36: #{bottleneck_v2_forward.1} parent=11 // pred_fallthru
          _
        // Predicated region
        $region37: #{bottleneck_v2_forward.1} parent=11 // pred_check
          %p346 = pneg %p210
        $region38: #{bottleneck_v2_forward.1} parent=11 // pred_check_branch
          %348 = sbr.rel (%p346) target = $region40
        $region39: #{bottleneck_v2_forward.1} parent=11 // pred_region
          %s350 = ssub.s32 2048, 2048
          %351 = vsyncadd [#allocation15], %s350
          %s352 = sshll.u32 [#allocation14], 4
          %s353 = int_to_ptr.vmem [resolvable:$true] %s352
          %358 = dma.hbm_to_vmem [thread:$0]  %s7, 2048, %s353, [#allocation15], 128, 128, 8
        $region40: #{bottleneck_v2_forward.1} parent=11 // pred_fallthru
          _
        // Predicated region
        $region41: #{bottleneck_v2_forward.1} parent=11 // pred_check
          %p359 = pneg %p231
        $region42: #{bottleneck_v2_forward.1} parent=11 // pred_check_branch
          %361 = sbr.rel (%p359) target = $region44
        $region43: #{bottleneck_v2_forward.1} parent=11 // pred_region
          %s363 = ssub.s32 16, 16
          %364 = vsyncadd [#allocation15], %s363
          %s366 = sshll.u32 [#allocation16], 4
          %s367 = int_to_ptr.vmem [resolvable:$true] %s366
          %369 = dma.hbm_to_vmem [thread:$0]  %s8, 16, %s367, [#allocation15]
        $region44: #{bottleneck_v2_forward.1} parent=11 // pred_fallthru
          _
      $region12: #{bottleneck_v2_forward.1} parent=5 // pred_fallthru
        _
      %p370 = scmp.lt.s32.totalorder %s25, 4
      // Predicated region
      $region45: #{bottleneck_v2_forward.1} parent=5 // pred_check
        %p371 = pneg %p370
      $region46: #{bottleneck_v2_forward.1} parent=5 // pred_check_branch
        %373 = sbr.rel (%p371) target = $region48
      $region47: #{bottleneck_v2_forward.1} parent=5 // pred_region
        // Predicated region
        $region49: #{bottleneck_v2_forward.1} parent=47 // pred_check
          %p374 = pneg %p57
        $region50: #{bottleneck_v2_forward.1} parent=47 // pred_check_branch
          %376 = sbr.rel (%p374) target = $region52
        $region51: #{bottleneck_v2_forward.1} parent=47 // pred_region
          %s377 = sand.u32 %s47, 1
          %s378 = scalar_lea.sflag [#allocation3], %s377
          %s379 = sand.u32 %s47, 1
          %s380 = smul.addr %s379, 80
          %s381 = scalar_lea.vmem [#allocation2], %s380
          %s383 = ssub.s32 1280, 1280
          %384 = vsyncadd %s378, %s383
          %s385 = smul.addr %s32, 10
          %s386 = smul.addr %s385, 128
          %s387 = scalar_lea.hbm %s0, %s386
          %s388 = sshll.u32 %s381, 4
          %s389 = int_to_ptr.vmem [resolvable:$true] %s388
          %394 = dma.hbm_to_vmem [thread:$0]  %s387, 1280, %s389, %s378, 128, 128, 8
        $region52: #{bottleneck_v2_forward.1} parent=47 // pred_fallthru
          _
      $region48: #{bottleneck_v2_forward.1} parent=5 // pred_fallthru
        _
      %p395 = scmp.le.s32.totalorder 1, %s25
      %p396 = scmp.lt.s32.totalorder %s25, 5
      %p397 = pnand %p395, %p396
      %p398 = pneg %p397
      // Predicated region
      $region53: #{bottleneck_v2_forward.1} parent=5 // pred_check
        _
      $region54: #{bottleneck_v2_forward.1} parent=5 // pred_check_branch
        %400 = sbr.rel (%p397) target = $region56
      $region55: #{bottleneck_v2_forward.1} parent=5 // pred_region
        %s401 = ssub.s32 %s25, 1
        %s402 = sand.u32 %s50, 1
        %s403 = scalar_lea.sflag [#allocation3], %s402
        %s404 = sand.u32 %s50, 1
        %s405 = smul.addr %s404, 80
        %s406 = scalar_lea.vmem [#allocation2], %s405
        // Predicated region
        $region57: #{bottleneck_v2_forward.1} parent=55 // pred_check
          %p407 = pneg %p63
        $region58: #{bottleneck_v2_forward.1} parent=55 // pred_check_branch
          %409 = sbr.rel (%p407) target = $region60
        $region59: #{bottleneck_v2_forward.1} parent=55 // pred_region
          %410 = dma.done %s403, 1280
        $region60: #{bottleneck_v2_forward.1} parent=55 // pred_fallthru
          _
        // Predicated region
        $region61: #{bottleneck_v2_forward.1} parent=55 // pred_check
          %p411 = pneg %p84
        $region62: #{bottleneck_v2_forward.1} parent=55 // pred_check_branch
          %413 = sbr.rel (%p411) target = $region64
        $region63: #{bottleneck_v2_forward.1} parent=55 // pred_region
          %414 = dma.done [#allocation6], 768
        $region64: #{bottleneck_v2_forward.1} parent=55 // pred_fallthru
          _
        // Predicated region
        $region65: #{bottleneck_v2_forward.1} parent=55 // pred_check
          %p415 = pneg %p105
        $region66: #{bottleneck_v2_forward.1} parent=55 // pred_check_branch
          %417 = sbr.rel (%p415) target = $region68
        $region67: #{bottleneck_v2_forward.1} parent=55 // pred_region
          %418 = dma.done [#allocation6], 32
        $region68: #{bottleneck_v2_forward.1} parent=55 // pred_fallthru
          _
        // Predicated region
        $region69: #{bottleneck_v2_forward.1} parent=55 // pred_check
          %p419 = pneg %p126
        $region70: #{bottleneck_v2_forward.1} parent=55 // pred_check_branch
          %421 = sbr.rel (%p419) target = $region72
        $region71: #{bottleneck_v2_forward.1} parent=55 // pred_region
          %422 = dma.done [#allocation9], 4096
        $region72: #{bottleneck_v2_forward.1} parent=55 // pred_fallthru
          _
        // Predicated region
        $region73: #{bottleneck_v2_forward.1} parent=55 // pred_check
          %p423 = pneg %p147
        $region74: #{bottleneck_v2_forward.1} parent=55 // pred_check_branch
          %425 = sbr.rel (%p423) target = $region76
        $region75: #{bottleneck_v2_forward.1} parent=55 // pred_region
          %426 = dma.done [#allocation9], 32
        $region76: #{bottleneck_v2_forward.1} parent=55 // pred_fallthru
          _
        // Predicated region
        $region77: #{bottleneck_v2_forward.1} parent=55 // pred_check
          %p427 = pneg %p168
        $region78: #{bottleneck_v2_forward.1} parent=55 // pred_check_branch
          %429 = sbr.rel (%p427) target = $region80
        $region79: #{bottleneck_v2_forward.1} parent=55 // pred_region
          %430 = dma.done [#allocation12], 18432
        $region80: #{bottleneck_v2_forward.1} parent=55 // pred_fallthru
          _
        // Predicated region
        $region81: #{bottleneck_v2_forward.1} parent=55 // pred_check
          %p431 = pneg %p189
        $region82: #{bottleneck_v2_forward.1} parent=55 // pred_check_branch
          %433 = sbr.rel (%p431) target = $region84
        $region83: #{bottleneck_v2_forward.1} parent=55 // pred_region
          %434 = dma.done [#allocation12], 16
        $region84: #{bottleneck_v2_forward.1} parent=55 // pred_fallthru
          _
        // Predicated region
        $region85: #{bottleneck_v2_forward.1} parent=55 // pred_check
          %p435 = pneg %p210
        $region86: #{bottleneck_v2_forward.1} parent=55 // pred_check_branch
          %437 = sbr.rel (%p435) target = $region88
        $region87: #{bottleneck_v2_forward.1} parent=55 // pred_region
          %438 = dma.done [#allocation15], 2048
        $region88: #{bottleneck_v2_forward.1} parent=55 // pred_fallthru
          _
        // Predicated region
        $region89: #{bottleneck_v2_forward.1} parent=55 // pred_check
          %p439 = pneg %p231
        $region90: #{bottleneck_v2_forward.1} parent=55 // pred_check_branch
          %441 = sbr.rel (%p439) target = $region92
        $region91: #{bottleneck_v2_forward.1} parent=55 // pred_region
          %442 = dma.done [#allocation15], 16
        $region92: #{bottleneck_v2_forward.1} parent=55 // pred_fallthru
          _
        %s443 = sand.u32 %s50, 1
        %s444 = scalar_lea.sflag [#allocation3], %s443
        %s445 = sand.u32 %s50, 1
        %s446 = smul.addr %s445, 80
        %s447 = scalar_lea.vmem [#allocation2], %s446
        %p448 = pneg %p63
        %p449 = pneg %p60
        %p450 = pneg %p84
        %p451 = pneg %p81
        %p452 = pneg %p105
        %p453 = pneg %p102
        %p454 = pneg %p126
        %p455 = pneg %p123
        %p456 = pneg %p147
        %p457 = pneg %p144
        %p458 = pneg %p168
        %p459 = pneg %p165
        %p460 = pneg %p189
        %p461 = pneg %p186
        %p462 = pneg %p210
        %p463 = pneg %p207
        %p464 = pneg %p231
        %p465 = pneg %p228
        %p466 = pneg %p259
        %p467 = pneg %p256
        %s468 = sand.u32 %s246, 1
        %s469 = scalar_lea.sflag [#allocation4], %s468
        %s470 = sand.u32 %s246, 1
        %s471 = smul.addr %s470, 32
        %s472 = scalar_lea.vmem [#allocation17], %s471
        %s473 = smul.u32 4, %s35
        %s474 = smul.u32 %s35, 4
        %s475 = smul.u32 %s474, 8
        %s476 = scalar_lea.vmem %s406, %s475 [#allocation2]
        %v477 = vld [vmem:[%s476] sm:$0xff]
        %v478 = vld [vmem:[%s476 + $0x8] sm:$0xff]
        %v479 = vld [vmem:[%s476 + $0x10] sm:$0xff]
        %v480 = vld [vmem:[%s476 + $0x18] sm:$0xff]
        %v481 = vld [vmem:[%s476 + $0x20] sm:$0xff]
        %v482 = vld [vmem:[%s476 + $0x28] sm:$0xff]
        %v483 = vld [vmem:[#allocation7] sm:$0x1]
        %v484 = vlaneseq
        %v485 = vshrl.u32 %v484, 7
        %v486 = vsub.s32 0, %v485
        %v487 = vrot.slane %v483, %v486
        %v488 = vmul.f32 %v477, %v487
        %v489 = vmul.f32 %v478, %v487
        %v490 = vmul.f32 %v479, %v487
        %v491 = vmul.f32 %v480, %v487
        %v492 = vmul.f32 %v481, %v487
        %v493 = vmul.f32 %v482, %v487
        %v494 = vld [vmem:[#allocation7 + $0x1] sm:$0x1]
        %v495 = vlaneseq
        %v496 = vshrl.u32 %v495, 7
        %v497 = vsub.s32 0, %v496
        %v498 = vrot.slane %v494, %v497
        %v499 = vadd.f32 %v488, %v498
        %v500 = vadd.f32 %v489, %v498
        %v501 = vadd.f32 %v490, %v498
        %v502 = vadd.f32 %v491, %v498
        %v503 = vadd.f32 %v492, %v498
        %v504 = vadd.f32 %v493, %v498
        %v505 = vmax.f32 %v499, 0.0
        %v506 = vmax.f32 %v500, 0.0
        %v507 = vmax.f32 %v501, 0.0
        %v508 = vmax.f32 %v502, 0.0
        %v509 = vmax.f32 %v503, 0.0
        %v510 = vmax.f32 %v504, 0.0
        %v511 = vld [vmem:[#allocation8] sm:$0xff]
        %v512 = vld [vmem:[#allocation8 + $0x8] sm:$0xff]
        %v513 = vld [vmem:[#allocation8 + $0x10] sm:$0xff]
        %v514 = vld [vmem:[#allocation8 + $0x18] sm:$0xff]
        %v515 = vld [vmem:[#allocation8 + $0x20] sm:$0xff]
        %v516 = vld [vmem:[#allocation8 + $0x28] sm:$0xff]
        %v517 = vld [vmem:[#allocation8 + $0x30] sm:$0xff]
        %v518 = vld [vmem:[#allocation8 + $0x38] sm:$0xff]
        %v519 = vld [vmem:[#allocation8 + $0x40] sm:$0xff]
        %v520 = vld [vmem:[#allocation8 + $0x48] sm:$0xff]
        %v521 = vld [vmem:[#allocation8 + $0x50] sm:$0xff]
        %v522 = vld [vmem:[#allocation8 + $0x58] sm:$0xff]
        %v523 = vld [vmem:[#allocation8 + $0x60] sm:$0xff]
        %v524 = vld [vmem:[#allocation8 + $0x68] sm:$0xff]
        %v525 = vld [vmem:[#allocation8 + $0x70] sm:$0xff]
        %v526 = vld [vmem:[#allocation8 + $0x78] sm:$0xff]
        %v527 = vld [vmem:[#allocation8 + $0x80] sm:$0xff]
        %v528 = vld [vmem:[#allocation8 + $0x88] sm:$0xff]
        %v529 = vld [vmem:[#allocation8 + $0x90] sm:$0xff]
        %v530 = vld [vmem:[#allocation8 + $0x98] sm:$0xff]
        %v531 = vld [vmem:[#allocation8 + $0xa0] sm:$0xff]
        %v532 = vld [vmem:[#allocation8 + $0xa8] sm:$0xff]
        %v533 = vld [vmem:[#allocation8 + $0xb0] sm:$0xff]
        %v534 = vld [vmem:[#allocation8 + $0xb8] sm:$0xff]
        %v535 = vld [vmem:[#allocation8 + $0xc0] sm:$0xff]
        %v536 = vld [vmem:[#allocation8 + $0xc8] sm:$0xff]
        %v537 = vld [vmem:[#allocation8 + $0xd0] sm:$0xff]
        %v538 = vld [vmem:[#allocation8 + $0xd8] sm:$0xff]
        %v539 = vld [vmem:[#allocation8 + $0xe0] sm:$0xff]
        %v540 = vld [vmem:[#allocation8 + $0xe8] sm:$0xff]
        %v541 = vld [vmem:[#allocation8 + $0xf0] sm:$0xff]
        %v542 = vld [vmem:[#allocation8 + $0xf8] sm:$0xff]
        %v543 = vld [vmem:[#allocation10] sm:$0x3]
        %v545 = vlaneseq
        %v546 = vshrl.u32 %v545, 7
        %v547 = vsub.s32 0, %v546
        %v548 = vrot.slane %v543, %v547
        %v549 = vlaneseq
        %v550 = vshrl.u32 %v549, 7
        %v551 = vsub.s32 1, %v550
        %v552 = vrot.slane %v543, %v551
        %555 = vmatprep.subr.mxu0 %v512
        %556 = vmatpush1.msra.mxu0 %v511
        %557 = vmatprep.subr.mxu0 %v514
        %558 = vmatpush1.msra.mxu0 %v513
        %559 = vmatprep.subr.mxu0 %v516
        %560 = vmatpush1.msra.mxu0 %v515
        %561 = vmatprep.subr.mxu0 %v518
        %562 = vmatpush1.msra.mxu0 %v517
        %563 = vmatprep.subr.mxu0 %v520
        %564 = vmatpush1.msra.mxu0 %v519
        %565 = vmatprep.subr.mxu0 %v522
        %566 = vmatpush1.msra.mxu0 %v521
        %567 = vmatprep.subr.mxu0 %v524
        %568 = vmatpush1.msra.mxu0 %v523
        %569 = vmatprep.subr.mxu0 %v526
        %570 = vmatpush1.msra.mxu0 %v525
        %571 = vmatprep.subr.mxu0 %v528
        %572 = vmatpush1.msra.mxu0 %v527
        %573 = vmatprep.subr.mxu0 %v530
        %574 = vmatpush1.msra.mxu0 %v529
        %575 = vmatprep.subr.mxu0 %v532
        %576 = vmatpush1.msra.mxu0 %v531
        %577 = vmatprep.subr.mxu0 %v534
        %578 = vmatpush1.msra.mxu0 %v533
        %579 = vmatprep.subr.mxu0 %v536
        %580 = vmatpush1.msra.mxu0 %v535
        %581 = vmatprep.subr.mxu0 %v538
        %582 = vmatpush1.msra.mxu0 %v537
        %583 = vmatprep.subr.mxu0 %v540
        %584 = vmatpush1.msra.mxu0 %v539
        %585 = vmatprep.subr.mxu0 %v542
        %586 = vmatpush1.msra.mxu0 %v541
        %587 = vmatprep.subr.mxu0 0.0
        %588 = vmatpush1.msra.mxu0 0.0
        %589 = vmatprep.subr.mxu0 0.0
        %590 = vmatpush1.msra.mxu0 0.0
        %591 = vmatprep.subr.mxu0 0.0
        %592 = vmatpush1.msra.mxu0 0.0
        %593 = vmatprep.subr.mxu0 0.0
        %594 = vmatpush1.msra.mxu0 0.0
        %595 = vmatprep.subr.mxu0 0.0
        %596 = vmatpush1.msra.mxu0 0.0
        %597 = vmatprep.subr.mxu0 0.0
        %598 = vmatpush1.msra.mxu0 0.0
        %599 = vmatprep.subr.mxu0 0.0
        %600 = vmatpush1.msra.mxu0 0.0
        %601 = vmatprep.subr.mxu0 0.0
        %602 = vmatpush1.msra.mxu0 0.0
        %603 = vmatprep.subr.mxu0 0.0
        %604 = vmatpush1.msra.mxu0 0.0
        %605 = vmatprep.subr.mxu0 0.0
        %606 = vmatpush1.msra.mxu0 0.0
        %607 = vmatprep.subr.mxu0 0.0
        %608 = vmatpush1.msra.mxu0 0.0
        %609 = vmatprep.subr.mxu0 0.0
        %610 = vmatpush1.msra.mxu0 0.0
        %611 = vmatprep.subr.mxu0 0.0
        %612 = vmatpush1.msra.mxu0 0.0
        %613 = vmatprep.subr.mxu0 0.0
        %614 = vmatpush1.msra.mxu0 0.0
        %615 = vmatprep.subr.mxu0 0.0
        %616 = vmatpush1.msra.mxu0 0.0
        %617 = vmatprep.subr.mxu0 0.0
        %618 = vmatpush1.msra.mxu0 0.0
        %619 = vmatprep.mubr.f32.mxu0 0.0
        %620 = vmatmul.mubr.f32.gmra.mrb[0].mxu0 %v505
        %v621 = vpop.f32.mrb[0].mxu0
        %v622 = vadd.f32 %v548, %v621
        %v623 = vpop.f32.mrb[0].mxu0
        %624 = vmatprep.mubr.f32.mxu0 0.0
        %625 = vmatmul.mubr.f32.gmra.mrb[0].mxu0 %v506
        %v626 = vpop.f32.mrb[0].mxu0
        %v627 = vadd.f32 %v548, %v626
        %v628 = vpop.f32.mrb[0].mxu0
        %v629 = vadd.f32 %v552, %v628
        %630 = vmatprep.mubr.f32.mxu0 0.0
        %631 = vmatmul.mubr.f32.gmra.mrb[0].mxu0 %v507
        %v632 = vpop.f32.mrb[0].mxu0
        %v633 = vadd.f32 %v548, %v632
        %v634 = vpop.f32.mrb[0].mxu0
        %v635 = vadd.f32 %v552, %v634
        %636 = vmatprep.mubr.f32.mxu0 0.0
        %637 = vmatmul.mubr.f32.gmra.mrb[0].mxu0 %v508
        %v638 = vpop.f32.mrb[0].mxu0
        %v639 = vadd.f32 %v548, %v638
        %v640 = vpop.f32.mrb[0].mxu0
        %v641 = vadd.f32 %v552, %v640
        %642 = vmatprep.mubr.f32.mxu0 0.0
        %643 = vmatmul.mubr.f32.gmra.mrb[0].mxu0 %v509
        %v644 = vpop.f32.mrb[0].mxu0
        %v645 = vadd.f32 %v548, %v644
        %v646 = vpop.f32.mrb[0].mxu0
        %v647 = vadd.f32 %v552, %v646
        %648 = vmatprep.mubr.f32.mxu0 0.0
        %649 = vmatmul.mubr.f32.gmra.mrb[0].mxu0 %v510
        %v650 = vpop.f32.mrb[0].mxu0
        %v651 = vadd.f32 %v548, %v650
        %v652 = vpop.f32.mrb[0].mxu0
        %653 = vdwg.mxu0
        %v654 = vmax.f32 %v622, 0.0
        %v655 = vmax.f32 %v627, 0.0
        %v656 = vmax.f32 %v633, 0.0
        %v657 = vmax.f32 %v639, 0.0
        %v658 = vmax.f32 %v645, 0.0
        %v659 = vmax.f32 %v651, 0.0
        %p660 = scmp.gt.s32.totalorder %s35, 0
        %s661 = scalar_select %p660, 1, 0
        %s662 = scvt.s32.f32 %s661
        %p663 = scmp.lt.s32.totalorder %s35, 1
        %s664 = scalar_select %p663, 1, 0
        %s665 = scvt.s32.f32 %s664
        %v666 = vld [vmem:[#allocation5] sm:$0xff]
        %v667 = vld [vmem:[#allocation5 + $0x8] sm:$0xff]
        %v668 = vld [vmem:[#allocation5 + $0x10] sm:$0xff]
        %v669 = vld [vmem:[#allocation5 + $0x18] sm:$0xff]
        %v670 = vld [vmem:[#allocation5 + $0x20] sm:$0xff]
        %v671 = vld [vmem:[#allocation5 + $0x28] sm:$0xff]
        %s672 = ssub.f32 1.0, %s662
        %v673 = vstv %s672
        %v674 = vmul.f32 %v666, %v673
        %v675 = vmul.f32 %v667, %v673
        %v676 = vmul.f32 %v668, %v673
        %v677 = vmul.f32 %v669, %v673
        %v678 = vmul.f32 %v670, %v673
        %v679 = vmul.f32 %v671, %v673
        %v680 = vsub.f32 1.0, %v674
        %v681 = vsub.f32 1.0, %v675
        %v682 = vsub.f32 1.0, %v676
        %v683 = vsub.f32 1.0, %v677
        %v684 = vsub.f32 1.0, %v678
        %v685 = vsub.f32 1.0, %v679
        %s686 = ssub.f32 1.0, %s665
        %v687 = vstv %s686
        %v688 = vmul.f32 %v666, %v687
        %v689 = vmul.f32 %v667, %v687
        %v690 = vmul.f32 %v668, %v687
        %v691 = vmul.f32 %v669, %v687
        %v692 = vmul.f32 %v670, %v687
        %v693 = vmul.f32 %v671, %v687
        %700 = vrot.lane.b32.xlu0 %v688, 127
        %v701 = vpop.permute.xlu0 %700
        %702 = vrot.lane.b32.xlu0 %v689, 127
        %v703 = vpop.permute.xlu0 %702
        %704 = vrot.lane.b32.xlu0 %v690, 127
        %v705 = vpop.permute.xlu0 %704
        %706 = vrot.lane.b32.xlu0 %v691, 127
        %v707 = vpop.permute.xlu0 %706
        %708 = vrot.lane.b32.xlu0 %v692, 127
        %v709 = vpop.permute.xlu0 %708
        %710 = vrot.lane.b32.xlu0 %v693, 127
        %v711 = vpop.permute.xlu0 %710
        %v718 = vsub.f32 %v680, %v701
        %v719 = vsub.f32 %v681, %v703
        %v720 = vsub.f32 %v682, %v705
        %v721 = vsub.f32 %v683, %v707
        %v722 = vsub.f32 %v684, %v709
        %v723 = vsub.f32 %v685, %v711
        %725 = vset.pattern.permute.xlu0 2
        %726 = vperm.xlu0 %725, %v718
        %v727 = vpop.permute.xlu0 %726
        %730 = vset.pattern.permute.xlu0 2
        %731 = vperm.xlu0 %730, %v719
        %v732 = vpop.permute.xlu0 %731
        %735 = vset.pattern.permute.xlu0 2
        %736 = vperm.xlu0 %735, %v720
        %v737 = vpop.permute.xlu0 %736
        %740 = vset.pattern.permute.xlu0 2
        %741 = vperm.xlu0 %740, %v721
        %v742 = vpop.permute.xlu0 %741
        %745 = vset.pattern.permute.xlu0 2
        %746 = vperm.xlu0 %745, %v722
        %v747 = vpop.permute.xlu0 %746
        %750 = vset.pattern.permute.xlu0 2
        %751 = vperm.xlu0 %750, %v723
        %v752 = vpop.permute.xlu0 %751
        %v754 = vmul.f32 %v654, %v727
        %v755 = vmul.f32 %v655, %v732
        %v756 = vmul.f32 %v656, %v737
        %v757 = vmul.f32 %v657, %v742
        %v758 = vmul.f32 %v658, %v747
        %v759 = vmul.f32 %v659, %v752
        %vm766 = vcmask 1040384
        %v767 = vrot.slane %v754, 7
        %v768 = vrot.slane %v755, 7
        %v769 = vsel %vm766, %v767, %v768
        %v770 = vrot.slane %v756, 7
        %v771 = vsel %vm766, %v768, %v770
        %v772 = vrot.slane %v757, 7
        %v773 = vsel %vm766, %v770, %v772
        %v774 = vrot.slane %v758, 7
        %v775 = vsel %vm766, %v772, %v774
        %v776 = vrot.slane %v759, 7
        %v777 = vsel %vm766, %v774, %v776
        %v784 = vsel %vm766, 0.0, %v767
        %786 = vset.pattern.permute.xlu0 0
        %787 = vperm.xlu0 %786, %v666
        %v788 = vpop.permute.xlu0 %787
        %791 = vset.pattern.permute.xlu0 0
        %792 = vperm.xlu0 %791, %v667
        %v793 = vpop.permute.xlu0 %792
        %796 = vset.pattern.permute.xlu0 0
        %797 = vperm.xlu0 %796, %v668
        %v798 = vpop.permute.xlu0 %797
        %801 = vset.pattern.permute.xlu0 0
        %802 = vperm.xlu0 %801, %v669
        %v803 = vpop.permute.xlu0 %802
        %806 = vset.pattern.permute.xlu0 0
        %807 = vperm.xlu0 %806, %v670
        %v808 = vpop.permute.xlu0 %807
        %811 = vset.pattern.permute.xlu0 0
        %812 = vperm.xlu0 %811, %v671
        %v813 = vpop.permute.xlu0 %812
        %v815 = vmul.f32 %v784, %v788
        %v816 = vmul.f32 %v769, %v793
        %v817 = vmul.f32 %v771, %v798
        %v818 = vmul.f32 %v773, %v803
        %v819 = vmul.f32 %v775, %v808
        %v820 = vmul.f32 %v777, %v813
        %vm821 = vcmask 1046528
        %v822 = vrot.slane %v754, 1
        %v823 = vrot.slane %v755, 1
        %v824 = vsel %vm821, %v822, %v823
        %v825 = vrot.slane %v756, 1
        %v826 = vsel %vm821, %v823, %v825
        %v827 = vrot.slane %v757, 1
        %v828 = vsel %vm821, %v825, %v827
        %v829 = vrot.slane %v758, 1
        %v830 = vsel %vm821, %v827, %v829
        %v831 = vrot.slane %v759, 1
        %v832 = vsel %vm821, %v829, %v831
        %v839 = vsel %vm821, %v831, 0.0
        %840 = vset.pattern.permute.xlu0 1
        %841 = vperm.xlu0 %840, %v666
        %v842 = vpop.permute.xlu0 %841
        %844 = vset.pattern.permute.xlu0 1
        %845 = vperm.xlu0 %844, %v667
        %v846 = vpop.permute.xlu0 %845
        %848 = vset.pattern.permute.xlu0 1
        %849 = vperm.xlu0 %848, %v668
        %v850 = vpop.permute.xlu0 %849
        %852 = vset.pattern.permute.xlu0 1
        %853 = vperm.xlu0 %852, %v669
        %v854 = vpop.permute.xlu0 %853
        %856 = vset.pattern.permute.xlu0 1
        %857 = vperm.xlu0 %856, %v670
        %v858 = vpop.permute.xlu0 %857
        %860 = vset.pattern.permute.xlu0 1
        %861 = vperm.xlu0 %860, %v671
        %v862 = vpop.permute.xlu0 %861
        %v864 = vmul.f32 %v824, %v842
        %v865 = vmul.f32 %v826, %v846
        %v866 = vmul.f32 %v828, %v850
        %v867 = vmul.f32 %v830, %v854
        %v868 = vmul.f32 %v832, %v858
        %v869 = vmul.f32 %v839, %v862
        %v870 = vld [vmem:[#allocation11] sm:$0xff]
        %v871 = vld [vmem:[#allocation11 + $0x8] sm:$0xff]
        %v872 = vld [vmem:[#allocation11 + $0x10] sm:$0xff]
        %v873 = vld [vmem:[#allocation11 + $0x18] sm:$0xff]
        %v874 = vld [vmem:[#allocation11 + $0x20] sm:$0xff]
        %v875 = vld [vmem:[#allocation11 + $0x28] sm:$0xff]
        %v876 = vld [vmem:[#allocation11 + $0x30] sm:$0xff]
        %v877 = vld [vmem:[#allocation11 + $0x38] sm:$0xff]
        %v878 = vld [vmem:[#allocation11 + $0x40] sm:$0xff]
        %v879 = vld [vmem:[#allocation11 + $0x48] sm:$0xff]
        %v880 = vld [vmem:[#allocation11 + $0x50] sm:$0xff]
        %v881 = vld [vmem:[#allocation11 + $0x58] sm:$0xff]
        %v882 = vld [vmem:[#allocation11 + $0x60] sm:$0xff]
        %v883 = vld [vmem:[#allocation11 + $0x68] sm:$0xff]
        %v884 = vld [vmem:[#allocation11 + $0x70] sm:$0xff]
        %v885 = vld [vmem:[#allocation11 + $0x78] sm:$0xff]
        %v886 = vld [vmem:[#allocation11 + $0x80] sm:$0xff]
        %v887 = vld [vmem:[#allocation11 + $0x88] sm:$0xff]
        %v888 = vld [vmem:[#allocation11 + $0x90] sm:$0xff]
        %v889 = vld [vmem:[#allocation11 + $0x98] sm:$0xff]
        %v890 = vld [vmem:[#allocation11 + $0xa0] sm:$0xff]
        %v891 = vld [vmem:[#allocation11 + $0xa8] sm:$0xff]
        %v892 = vld [vmem:[#allocation11 + $0xb0] sm:$0xff]
        %v893 = vld [vmem:[#allocation11 + $0xb8] sm:$0xff]
        %v894 = vld [vmem:[#allocation11 + $0xc0] sm:$0xff]
        %v895 = vld [vmem:[#allocation11 + $0xc8] sm:$0xff]
        %v896 = vld [vmem:[#allocation11 + $0xd0] sm:$0xff]
        %v897 = vld [vmem:[#allocation11 + $0xd8] sm:$0xff]
        %v898 = vld [vmem:[#allocation11 + $0xe0] sm:$0xff]
        %v899 = vld [vmem:[#allocation11 + $0xe8] sm:$0xff]
        %v900 = vld [vmem:[#allocation11 + $0xf0] sm:$0xff]
        %v901 = vld [vmem:[#allocation11 + $0xf8] sm:$0xff]
        %902 = vmatprep.subr.mxu0 0.0
        %903 = vmatpush1.msra.mxu0 %v886
        %904 = vmatprep.subr.mxu0 0.0
        %905 = vmatpush1.msra.mxu0 %v887
        %906 = vmatprep.subr.mxu0 0.0
        %907 = vmatpush1.msra.mxu0 %v888
        %908 = vmatprep.subr.mxu0 0.0
        %909 = vmatpush1.msra.mxu0 %v889
        %910 = vmatprep.subr.mxu0 0.0
        %911 = vmatpush1.msra.mxu0 %v890
        %912 = vmatprep.subr.mxu0 0.0
        %913 = vmatpush1.msra.mxu0 %v891
        %914 = vmatprep.subr.mxu0 0.0
        %915 = vmatpush1.msra.mxu0 %v892
        %916 = vmatprep.subr.mxu0 0.0
        %917 = vmatpush1.msra.mxu0 %v893
        %918 = vmatprep.subr.mxu0 0.0
        %919 = vmatpush1.msra.mxu0 %v894
        %920 = vmatprep.subr.mxu0 0.0
        %921 = vmatpush1.msra.mxu0 %v895
        %922 = vmatprep.subr.mxu0 0.0
        %923 = vmatpush1.msra.mxu0 %v896
        %924 = vmatprep.subr.mxu0 0.0
        %925 = vmatpush1.msra.mxu0 %v897
        %926 = vmatprep.subr.mxu0 0.0
        %927 = vmatpush1.msra.mxu0 %v898
        %928 = vmatprep.subr.mxu0 0.0
        %929 = vmatpush1.msra.mxu0 %v899
        %930 = vmatprep.subr.mxu0 0.0
        %931 = vmatpush1.msra.mxu0 %v900
        %932 = vmatprep.subr.mxu0 0.0
        %933 = vmatpush1.msra.mxu0 %v901
        %934 = vmatprep.subr.mxu0 0.0
        %935 = vmatpush1.msra.mxu0 0.0
        %936 = vmatprep.subr.mxu0 0.0
        %937 = vmatpush1.msra.mxu0 0.0
        %938 = vmatprep.subr.mxu0 0.0
        %939 = vmatpush1.msra.mxu0 0.0
        %940 = vmatprep.subr.mxu0 0.0
        %941 = vmatpush1.msra.mxu0 0.0
        %942 = vmatprep.subr.mxu0 0.0
        %943 = vmatpush1.msra.mxu0 0.0
        %944 = vmatprep.subr.mxu0 0.0
        %945 = vmatpush1.msra.mxu0 0.0
        %946 = vmatprep.subr.mxu0 0.0
        %947 = vmatpush1.msra.mxu0 0.0
        %948 = vmatprep.subr.mxu0 0.0
        %949 = vmatpush1.msra.mxu0 0.0
        %950 = vmatprep.subr.mxu0 0.0
        %951 = vmatpush1.msra.mxu0 0.0
        %952 = vmatprep.subr.mxu0 0.0
        %953 = vmatpush1.msra.mxu0 0.0
        %954 = vmatprep.subr.mxu0 0.0
        %955 = vmatpush1.msra.mxu0 0.0
        %956 = vmatprep.subr.mxu0 0.0
        %957 = vmatpush1.msra.mxu0 0.0
        %958 = vmatprep.subr.mxu0 0.0
        %959 = vmatpush1.msra.mxu0 0.0
        %960 = vmatprep.subr.mxu0 0.0
        %961 = vmatpush1.msra.mxu0 0.0
        %962 = vmatprep.subr.mxu0 0.0
        %963 = vmatpush1.msra.mxu0 0.0
        %964 = vmatprep.subr.mxu0 0.0
        %965 = vmatpush1.msra.mxu0 0.0
        %966 = vmatprep.mubr.f32.mxu0 0.0
        %967 = vmatmul.mubr.f32.gmra.mrb[0].mxu0 %v754
        %v968 = vpop.f32.mrb[0].mxu0
        %v969 = vadd.f32 0.0, %v968
        %v970 = vpop.f32.mrb[0].mxu0
        %971 = vmatprep.mubr.f32.mxu0 0.0
        %972 = vmatmul.mubr.f32.gmra.mrb[0].mxu0 %v755
        %v973 = vpop.f32.mrb[0].mxu0
        %v974 = vadd.f32 0.0, %v973
        %v975 = vpop.f32.mrb[0].mxu0
        %976 = vmatprep.mubr.f32.mxu0 0.0
        %977 = vmatmul.mubr.f32.gmra.mrb[0].mxu0 %v756
        %v978 = vpop.f32.mrb[0].mxu0
        %v979 = vadd.f32 0.0, %v978
        %v980 = vpop.f32.mrb[0].mxu0
        %981 = vmatprep.mubr.f32.mxu0 0.0
        %982 = vmatmul.mubr.f32.gmra.mrb[0].mxu0 %v757
        %v983 = vpop.f32.mrb[0].mxu0
        %v984 = vadd.f32 0.0, %v983
        %v985 = vpop.f32.mrb[0].mxu0
        %986 = vdwg.mxu0
        %987 = vmatprep.subr.mxu0 0.0
        %988 = vmatpush1.msra.mxu0 %v870
        %989 = vmatprep.subr.mxu0 0.0
        %990 = vmatpush1.msra.mxu0 %v871
        %991 = vmatprep.subr.mxu0 0.0
        %992 = vmatpush1.msra.mxu0 %v872
        %993 = vmatprep.subr.mxu0 0.0
        %994 = vmatpush1.msra.mxu0 %v873
        %995 = vmatprep.subr.mxu0 0.0
        %996 = vmatpush1.msra.mxu0 %v874
        %997 = vmatprep.subr.mxu0 0.0
        %998 = vmatpush1.msra.mxu0 %v875
        %999 = vmatprep.subr.mxu0 0.0
        %1000 = vmatpush1.msra.mxu0 %v876
        %1001 = vmatprep.subr.mxu0 0.0
        %1002 = vmatpush1.msra.mxu0 %v877
        %1003 = vmatprep.subr.mxu0 0.0
        %1004 = vmatpush1.msra.mxu0 %v878
        %1005 = vmatprep.subr.mxu0 0.0
        %1006 = vmatpush1.msra.mxu0 %v879
        %1007 = vmatprep.subr.mxu0 0.0
        %1008 = vmatpush1.msra.mxu0 %v880
        %1009 = vmatprep.subr.mxu0 0.0
        %1010 = vmatpush1.msra.mxu0 %v881
        %1011 = vmatprep.subr.mxu0 0.0
        %1012 = vmatpush1.msra.mxu0 %v882
        %1013 = vmatprep.subr.mxu0 0.0
        %1014 = vmatpush1.msra.mxu0 %v883
        %1015 = vmatprep.subr.mxu0 0.0
        %1016 = vmatpush1.msra.mxu0 %v884
        %1017 = vmatprep.subr.mxu0 0.0
        %1018 = vmatpush1.msra.mxu0 %v885
        %1019 = vmatprep.subr.mxu0 0.0
        %1020 = vmatpush1.msra.mxu0 0.0
        %1021 = vmatprep.subr.mxu0 0.0
        %1022 = vmatpush1.msra.mxu0 0.0
        %1023 = vmatprep.subr.mxu0 0.0
        %1024 = vmatpush1.msra.mxu0 0.0
        %1025 = vmatprep.subr.mxu0 0.0
        %1026 = vmatpush1.msra.mxu0 0.0
        %1027 = vmatprep.subr.mxu0 0.0
        %1028 = vmatpush1.msra.mxu0 0.0
        %1029 = vmatprep.subr.mxu0 0.0
        %1030 = vmatpush1.msra.mxu0 0.0
        %1031 = vmatprep.subr.mxu0 0.0
        %1032 = vmatpush1.msra.mxu0 0.0
        %1033 = vmatprep.subr.mxu0 0.0
        %1034 = vmatpush1.msra.mxu0 0.0
        %1035 = vmatprep.subr.mxu0 0.0
        %1036 = vmatpush1.msra.mxu0 0.0
        %1037 = vmatprep.subr.mxu0 0.0
        %1038 = vmatpush1.msra.mxu0 0.0
        %1039 = vmatprep.subr.mxu0 0.0
        %1040 = vmatpush1.msra.mxu0 0.0
        %1041 = vmatprep.subr.mxu0 0.0
        %1042 = vmatpush1.msra.mxu0 0.0
        %1043 = vmatprep.subr.mxu0 0.0
        %1044 = vmatpush1.msra.mxu0 0.0
        %1045 = vmatprep.subr.mxu0 0.0
        %1046 = vmatpush1.msra.mxu0 0.0
        %1047 = vmatprep.subr.mxu0 0.0
        %1048 = vmatpush1.msra.mxu0 0.0
        %1049 = vmatprep.subr.mxu0 0.0
        %1050 = vmatpush1.msra.mxu0 0.0
        %1051 = vmatprep.mubr.f32.mxu0 0.0
        %1052 = vmatmul.mubr.f32.gmra.mrb[0].mxu0 %v815
        %v1053 = vpop.f32.mrb[0].mxu0
        %v1054 = vadd.f32 %v969, %v1053
        %v1055 = vpop.f32.mrb[0].mxu0
        %1056 = vmatprep.mubr.f32.mxu0 0.0
        %1057 = vmatmul.mubr.f32.gmra.mrb[0].mxu0 %v816
        %v1058 = vpop.f32.mrb[0].mxu0
        %v1059 = vadd.f32 %v974, %v1058
        %v1060 = vpop.f32.mrb[0].mxu0
        %1061 = vmatprep.mubr.f32.mxu0 0.0
        %1062 = vmatmul.mubr.f32.gmra.mrb[0].mxu0 %v817
        %v1063 = vpop.f32.mrb[0].mxu0
        %v1064 = vadd.f32 %v979, %v1063
        %v1065 = vpop.f32.mrb[0].mxu0
        %1066 = vmatprep.mubr.f32.mxu0 0.0
        %1067 = vmatmul.mubr.f32.gmra.mrb[0].mxu0 %v818
        %v1068 = vpop.f32.mrb[0].mxu0
        %v1069 = vadd.f32 %v984, %v1068
        %v1070 = vpop.f32.mrb[0].mxu0
        %1071 = vdwg.mxu0
        %v1072 = vld [vmem:[#allocation11 + $0x100] sm:$0xff]
        %v1073 = vld [vmem:[#allocation11 + $0x108] sm:$0xff]
        %v1074 = vld [vmem:[#allocation11 + $0x110] sm:$0xff]
        %v1075 = vld [vmem:[#allocation11 + $0x118] sm:$0xff]
        %v1076 = vld [vmem:[#allocation11 + $0x120] sm:$0xff]
        %v1077 = vld [vmem:[#allocation11 + $0x128] sm:$0xff]
        %v1078 = vld [vmem:[#allocation11 + $0x130] sm:$0xff]
        %v1079 = vld [vmem:[#allocation11 + $0x138] sm:$0xff]
        %v1080 = vld [vmem:[#allocation11 + $0x140] sm:$0xff]
        %v1081 = vld [vmem:[#allocation11 + $0x148] sm:$0xff]
        %v1082 = vld [vmem:[#allocation11 + $0x150] sm:$0xff]
        %v1083 = vld [vmem:[#allocation11 + $0x158] sm:$0xff]
        %v1084 = vld [vmem:[#allocation11 + $0x160] sm:$0xff]
        %v1085 = vld [vmem:[#allocation11 + $0x168] sm:$0xff]
        %v1086 = vld [vmem:[#allocation11 + $0x170] sm:$0xff]
        %v1087 = vld [vmem:[#allocation11 + $0x178] sm:$0xff]
        %1088 = vmatprep.subr.mxu0 0.0
        %1089 = vmatpush1.msra.mxu0 %v1072
        %1090 = vmatprep.subr.mxu0 0.0
        %1091 = vmatpush1.msra.mxu0 %v1073
        %1092 = vmatprep.subr.mxu0 0.0
        %1093 = vmatpush1.msra.mxu0 %v1074
        %1094 = vmatprep.subr.mxu0 0.0
        %1095 = vmatpush1.msra.mxu0 %v1075
        %1096 = vmatprep.subr.mxu0 0.0
        %1097 = vmatpush1.msra.mxu0 %v1076
        %1098 = vmatprep.subr.mxu0 0.0
        %1099 = vmatpush1.msra.mxu0 %v1077
        %1100 = vmatprep.subr.mxu0 0.0
        %1101 = vmatpush1.msra.mxu0 %v1078
        %1102 = vmatprep.subr.mxu0 0.0
        %1103 = vmatpush1.msra.mxu0 %v1079
        %1104 = vmatprep.subr.mxu0 0.0
        %1105 = vmatpush1.msra.mxu0 %v1080
        %1106 = vmatprep.subr.mxu0 0.0
        %1107 = vmatpush1.msra.mxu0 %v1081
        %1108 = vmatprep.subr.mxu0 0.0
        %1109 = vmatpush1.msra.mxu0 %v1082
        %1110 = vmatprep.subr.mxu0 0.0
        %1111 = vmatpush1.msra.mxu0 %v1083
        %1112 = vmatprep.subr.mxu0 0.0
        %1113 = vmatpush1.msra.mxu0 %v1084
        %1114 = vmatprep.subr.mxu0 0.0
        %1115 = vmatpush1.msra.mxu0 %v1085
        %1116 = vmatprep.subr.mxu0 0.0
        %1117 = vmatpush1.msra.mxu0 %v1086
        %1118 = vmatprep.subr.mxu0 0.0
        %1119 = vmatpush1.msra.mxu0 %v1087
        %1120 = vmatprep.subr.mxu0 0.0
        %1121 = vmatpush1.msra.mxu0 0.0
        %1122 = vmatprep.subr.mxu0 0.0
        %1123 = vmatpush1.msra.mxu0 0.0
        %1124 = vmatprep.subr.mxu0 0.0
        %1125 = vmatpush1.msra.mxu0 0.0
        %1126 = vmatprep.subr.mxu0 0.0
        %1127 = vmatpush1.msra.mxu0 0.0
        %1128 = vmatprep.subr.mxu0 0.0
        %1129 = vmatpush1.msra.mxu0 0.0
        %1130 = vmatprep.subr.mxu0 0.0
        %1131 = vmatpush1.msra.mxu0 0.0
        %1132 = vmatprep.subr.mxu0 0.0
        %1133 = vmatpush1.msra.mxu0 0.0
        %1134 = vmatprep.subr.mxu0 0.0
        %1135 = vmatpush1.msra.mxu0 0.0
        %1136 = vmatprep.subr.mxu0 0.0
        %1137 = vmatpush1.msra.mxu0 0.0
        %1138 = vmatprep.subr.mxu0 0.0
        %1139 = vmatpush1.msra.mxu0 0.0
        %1140 = vmatprep.subr.mxu0 0.0
        %1141 = vmatpush1.msra.mxu0 0.0
        %1142 = vmatprep.subr.mxu0 0.0
        %1143 = vmatpush1.msra.mxu0 0.0
        %1144 = vmatprep.subr.mxu0 0.0
        %1145 = vmatpush1.msra.mxu0 0.0
        %1146 = vmatprep.subr.mxu0 0.0
        %1147 = vmatpush1.msra.mxu0 0.0
        %1148 = vmatprep.subr.mxu0 0.0
        %1149 = vmatpush1.msra.mxu0 0.0
        %1150 = vmatprep.subr.mxu0 0.0
        %1151 = vmatpush1.msra.mxu0 0.0
        %1152 = vmatprep.mubr.f32.mxu0 0.0
        %1153 = vmatmul.mubr.f32.gmra.mrb[0].mxu0 %v864
        %v1154 = vpop.f32.mrb[0].mxu0
        %v1155 = vadd.f32 0.0, %v1154
        %v1156 = vpop.f32.mrb[0].mxu0
        %1157 = vmatprep.mubr.f32.mxu0 0.0
        %1158 = vmatmul.mubr.f32.gmra.mrb[0].mxu0 %v865
        %v1159 = vpop.f32.mrb[0].mxu0
        %v1160 = vadd.f32 0.0, %v1159
        %v1161 = vpop.f32.mrb[0].mxu0
        %1162 = vmatprep.mubr.f32.mxu0 0.0
        %1163 = vmatmul.mubr.f32.gmra.mrb[0].mxu0 %v866
        %v1164 = vpop.f32.mrb[0].mxu0
        %v1165 = vadd.f32 0.0, %v1164
        %v1166 = vpop.f32.mrb[0].mxu0
        %1167 = vmatprep.mubr.f32.mxu0 0.0
        %1168 = vmatmul.mubr.f32.gmra.mrb[0].mxu0 %v867
        %v1169 = vpop.f32.mrb[0].mxu0
        %v1170 = vadd.f32 0.0, %v1169
        %v1171 = vpop.f32.mrb[0].mxu0
        %1172 = vdwg.mxu0
        %v1173 = vadd.f32 %v1054, %v1155
        %v1174 = vadd.f32 %v1059, %v1160
        %v1175 = vadd.f32 %v1064, %v1165
        %v1176 = vadd.f32 %v1069, %v1170
        %v1177 = vld [vmem:[#allocation11 + $0x180] sm:$0xff]
        %v1178 = vld [vmem:[#allocation11 + $0x188] sm:$0xff]
        %v1179 = vld [vmem:[#allocation11 + $0x190] sm:$0xff]
        %v1180 = vld [vmem:[#allocation11 + $0x198] sm:$0xff]
        %v1181 = vld [vmem:[#allocation11 + $0x1a0] sm:$0xff]
        %v1182 = vld [vmem:[#allocation11 + $0x1a8] sm:$0xff]
        %v1183 = vld [vmem:[#allocation11 + $0x1b0] sm:$0xff]
        %v1184 = vld [vmem:[#allocation11 + $0x1b8] sm:$0xff]
        %v1185 = vld [vmem:[#allocation11 + $0x1c0] sm:$0xff]
        %v1186 = vld [vmem:[#allocation11 + $0x1c8] sm:$0xff]
        %v1187 = vld [vmem:[#allocation11 + $0x1d0] sm:$0xff]
        %v1188 = vld [vmem:[#allocation11 + $0x1d8] sm:$0xff]
        %v1189 = vld [vmem:[#allocation11 + $0x1e0] sm:$0xff]
        %v1190 = vld [vmem:[#allocation11 + $0x1e8] sm:$0xff]
        %v1191 = vld [vmem:[#allocation11 + $0x1f0] sm:$0xff]
        %v1192 = vld [vmem:[#allocation11 + $0x1f8] sm:$0xff]
        %1193 = vmatprep.subr.mxu0 0.0
        %1194 = vmatpush1.msra.mxu0 %v1177
        %1195 = vmatprep.subr.mxu0 0.0
        %1196 = vmatpush1.msra.mxu0 %v1178
        %1197 = vmatprep.subr.mxu0 0.0
        %1198 = vmatpush1.msra.mxu0 %v1179
        %1199 = vmatprep.subr.mxu0 0.0
        %1200 = vmatpush1.msra.mxu0 %v1180
        %1201 = vmatprep.subr.mxu0 0.0
        %1202 = vmatpush1.msra.mxu0 %v1181
        %1203 = vmatprep.subr.mxu0 0.0
        %1204 = vmatpush1.msra.mxu0 %v1182
        %1205 = vmatprep.subr.mxu0 0.0
        %1206 = vmatpush1.msra.mxu0 %v1183
        %1207 = vmatprep.subr.mxu0 0.0
        %1208 = vmatpush1.msra.mxu0 %v1184
        %1209 = vmatprep.subr.mxu0 0.0
        %1210 = vmatpush1.msra.mxu0 %v1185
        %1211 = vmatprep.subr.mxu0 0.0
        %1212 = vmatpush1.msra.mxu0 %v1186
        %1213 = vmatprep.subr.mxu0 0.0
        %1214 = vmatpush1.msra.mxu0 %v1187
        %1215 = vmatprep.subr.mxu0 0.0
        %1216 = vmatpush1.msra.mxu0 %v1188
        %1217 = vmatprep.subr.mxu0 0.0
        %1218 = vmatpush1.msra.mxu0 %v1189
        %1219 = vmatprep.subr.mxu0 0.0
        %1220 = vmatpush1.msra.mxu0 %v1190
        %1221 = vmatprep.subr.mxu0 0.0
        %1222 = vmatpush1.msra.mxu0 %v1191
        %1223 = vmatprep.subr.mxu0 0.0
        %1224 = vmatpush1.msra.mxu0 %v1192
        %1225 = vmatprep.subr.mxu0 0.0
        %1226 = vmatpush1.msra.mxu0 0.0
        %1227 = vmatprep.subr.mxu0 0.0
        %1228 = vmatpush1.msra.mxu0 0.0
        %1229 = vmatprep.subr.mxu0 0.0
        %1230 = vmatpush1.msra.mxu0 0.0
        %1231 = vmatprep.subr.mxu0 0.0
        %1232 = vmatpush1.msra.mxu0 0.0
        %1233 = vmatprep.subr.mxu0 0.0
        %1234 = vmatpush1.msra.mxu0 0.0
        %1235 = vmatprep.subr.mxu0 0.0
        %1236 = vmatpush1.msra.mxu0 0.0
        %1237 = vmatprep.subr.mxu0 0.0
        %1238 = vmatpush1.msra.mxu0 0.0
        %1239 = vmatprep.subr.mxu0 0.0
        %1240 = vmatpush1.msra.mxu0 0.0
        %1241 = vmatprep.subr.mxu0 0.0
        %1242 = vmatpush1.msra.mxu0 0.0
        %1243 = vmatprep.subr.mxu0 0.0
        %1244 = vmatpush1.msra.mxu0 0.0
        %1245 = vmatprep.subr.mxu0 0.0
        %1246 = vmatpush1.msra.mxu0 0.0
        %1247 = vmatprep.subr.mxu0 0.0
        %1248 = vmatpush1.msra.mxu0 0.0
        %1249 = vmatprep.subr.mxu0 0.0
        %1250 = vmatpush1.msra.mxu0 0.0
        %1251 = vmatprep.subr.mxu0 0.0
        %1252 = vmatpush1.msra.mxu0 0.0
        %1253 = vmatprep.subr.mxu0 0.0
        %1254 = vmatpush1.msra.mxu0 0.0
        %1255 = vmatprep.subr.mxu0 0.0
        %1256 = vmatpush1.msra.mxu0 0.0
        %1257 = vmatprep.mubr.f32.mxu0 0.0
        %1258 = vmatmul.mubr.f32.gmra.mrb[0].mxu0 %v816
        %v1259 = vpop.f32.mrb[0].mxu0
        %v1260 = vadd.f32 0.0, %v1259
        %v1261 = vpop.f32.mrb[0].mxu0
        %1262 = vmatprep.mubr.f32.mxu0 0.0
        %1263 = vmatmul.mubr.f32.gmra.mrb[0].mxu0 %v817
        %v1264 = vpop.f32.mrb[0].mxu0
        %v1265 = vadd.f32 0.0, %v1264
        %v1266 = vpop.f32.mrb[0].mxu0
        %1267 = vmatprep.mubr.f32.mxu0 0.0
        %1268 = vmatmul.mubr.f32.gmra.mrb[0].mxu0 %v818
        %v1269 = vpop.f32.mrb[0].mxu0
        %v1270 = vadd.f32 0.0, %v1269
        %v1271 = vpop.f32.mrb[0].mxu0
        %1272 = vmatprep.mubr.f32.mxu0 0.0
        %1273 = vmatmul.mubr.f32.gmra.mrb[0].mxu0 %v819
        %v1274 = vpop.f32.mrb[0].mxu0
        %v1275 = vadd.f32 0.0, %v1274
        %v1276 = vpop.f32.mrb[0].mxu0
        %1277 = vdwg.mxu0
        %v1278 = vadd.f32 %v1173, %v1260
        %v1279 = vadd.f32 %v1174, %v1265
        %v1280 = vadd.f32 %v1175, %v1270
        %v1281 = vadd.f32 %v1176, %v1275
        %v1282 = vld [vmem:[#allocation11 + $0x200] sm:$0xff]
        %v1283 = vld [vmem:[#allocation11 + $0x208] sm:$0xff]
        %v1284 = vld [vmem:[#allocation11 + $0x210] sm:$0xff]
        %v1285 = vld [vmem:[#allocation11 + $0x218] sm:$0xff]
        %v1286 = vld [vmem:[#allocation11 + $0x220] sm:$0xff]
        %v1287 = vld [vmem:[#allocation11 + $0x228] sm:$0xff]
        %v1288 = vld [vmem:[#allocation11 + $0x230] sm:$0xff]
        %v1289 = vld [vmem:[#allocation11 + $0x238] sm:$0xff]
        %v1290 = vld [vmem:[#allocation11 + $0x240] sm:$0xff]
        %v1291 = vld [vmem:[#allocation11 + $0x248] sm:$0xff]
        %v1292 = vld [vmem:[#allocation11 + $0x250] sm:$0xff]
        %v1293 = vld [vmem:[#allocation11 + $0x258] sm:$0xff]
        %v1294 = vld [vmem:[#allocation11 + $0x260] sm:$0xff]
        %v1295 = vld [vmem:[#allocation11 + $0x268] sm:$0xff]
        %v1296 = vld [vmem:[#allocation11 + $0x270] sm:$0xff]
        %v1297 = vld [vmem:[#allocation11 + $0x278] sm:$0xff]
        %1298 = vmatprep.subr.mxu0 0.0
        %1299 = vmatpush1.msra.mxu0 %v1282
        %1300 = vmatprep.subr.mxu0 0.0
        %1301 = vmatpush1.msra.mxu0 %v1283
        %1302 = vmatprep.subr.mxu0 0.0
        %1303 = vmatpush1.msra.mxu0 %v1284
        %1304 = vmatprep.subr.mxu0 0.0
        %1305 = vmatpush1.msra.mxu0 %v1285
        %1306 = vmatprep.subr.mxu0 0.0
        %1307 = vmatpush1.msra.mxu0 %v1286
        %1308 = vmatprep.subr.mxu0 0.0
        %1309 = vmatpush1.msra.mxu0 %v1287
        %1310 = vmatprep.subr.mxu0 0.0
        %1311 = vmatpush1.msra.mxu0 %v1288
        %1312 = vmatprep.subr.mxu0 0.0
        %1313 = vmatpush1.msra.mxu0 %v1289
        %1314 = vmatprep.subr.mxu0 0.0
        %1315 = vmatpush1.msra.mxu0 %v1290
        %1316 = vmatprep.subr.mxu0 0.0
        %1317 = vmatpush1.msra.mxu0 %v1291
        %1318 = vmatprep.subr.mxu0 0.0
        %1319 = vmatpush1.msra.mxu0 %v1292
        %1320 = vmatprep.subr.mxu0 0.0
        %1321 = vmatpush1.msra.mxu0 %v1293
        %1322 = vmatprep.subr.mxu0 0.0
        %1323 = vmatpush1.msra.mxu0 %v1294
        %1324 = vmatprep.subr.mxu0 0.0
        %1325 = vmatpush1.msra.mxu0 %v1295
        %1326 = vmatprep.subr.mxu0 0.0
        %1327 = vmatpush1.msra.mxu0 %v1296
        %1328 = vmatprep.subr.mxu0 0.0
        %1329 = vmatpush1.msra.mxu0 %v1297
        %1330 = vmatprep.subr.mxu0 0.0
        %1331 = vmatpush1.msra.mxu0 0.0
        %1332 = vmatprep.subr.mxu0 0.0
        %1333 = vmatpush1.msra.mxu0 0.0
        %1334 = vmatprep.subr.mxu0 0.0
        %1335 = vmatpush1.msra.mxu0 0.0
        %1336 = vmatprep.subr.mxu0 0.0
        %1337 = vmatpush1.msra.mxu0 0.0
        %1338 = vmatprep.subr.mxu0 0.0
        %1339 = vmatpush1.msra.mxu0 0.0
        %1340 = vmatprep.subr.mxu0 0.0
        %1341 = vmatpush1.msra.mxu0 0.0
        %1342 = vmatprep.subr.mxu0 0.0
        %1343 = vmatpush1.msra.mxu0 0.0
        %1344 = vmatprep.subr.mxu0 0.0
        %1345 = vmatpush1.msra.mxu0 0.0
        %1346 = vmatprep.subr.mxu0 0.0
        %1347 = vmatpush1.msra.mxu0 0.0
        %1348 = vmatprep.subr.mxu0 0.0
        %1349 = vmatpush1.msra.mxu0 0.0
        %1350 = vmatprep.subr.mxu0 0.0
        %1351 = vmatpush1.msra.mxu0 0.0
        %1352 = vmatprep.subr.mxu0 0.0
        %1353 = vmatpush1.msra.mxu0 0.0
        %1354 = vmatprep.subr.mxu0 0.0
        %1355 = vmatpush1.msra.mxu0 0.0
        %1356 = vmatprep.subr.mxu0 0.0
        %1357 = vmatpush1.msra.mxu0 0.0
        %1358 = vmatprep.subr.mxu0 0.0
        %1359 = vmatpush1.msra.mxu0 0.0
        %1360 = vmatprep.subr.mxu0 0.0
        %1361 = vmatpush1.msra.mxu0 0.0
        %1362 = vmatprep.mubr.f32.mxu0 0.0
        %1363 = vmatmul.mubr.f32.gmra.mrb[0].mxu0 %v755
        %v1364 = vpop.f32.mrb[0].mxu0
        %v1365 = vadd.f32 0.0, %v1364
        %v1366 = vpop.f32.mrb[0].mxu0
        %1367 = vmatprep.mubr.f32.mxu0 0.0
        %1368 = vmatmul.mubr.f32.gmra.mrb[0].mxu0 %v756
        %v1369 = vpop.f32.mrb[0].mxu0
        %v1370 = vadd.f32 0.0, %v1369
        %v1371 = vpop.f32.mrb[0].mxu0
        %1372 = vmatprep.mubr.f32.mxu0 0.0
        %1373 = vmatmul.mubr.f32.gmra.mrb[0].mxu0 %v757
        %v1374 = vpop.f32.mrb[0].mxu0
        %v1375 = vadd.f32 0.0, %v1374
        %v1376 = vpop.f32.mrb[0].mxu0
        %1377 = vmatprep.mubr.f32.mxu0 0.0
        %1378 = vmatmul.mubr.f32.gmra.mrb[0].mxu0 %v758
        %v1379 = vpop.f32.mrb[0].mxu0
        %v1380 = vadd.f32 0.0, %v1379
        %v1381 = vpop.f32.mrb[0].mxu0
        %1382 = vdwg.mxu0
        %v1383 = vadd.f32 %v1278, %v1365
        %v1384 = vadd.f32 %v1279, %v1370
        %v1385 = vadd.f32 %v1280, %v1375
        %v1386 = vadd.f32 %v1281, %v1380
        %v1387 = vld [vmem:[#allocation11 + $0x280] sm:$0xff]
        %v1388 = vld [vmem:[#allocation11 + $0x288] sm:$0xff]
        %v1389 = vld [vmem:[#allocation11 + $0x290] sm:$0xff]
        %v1390 = vld [vmem:[#allocation11 + $0x298] sm:$0xff]
        %v1391 = vld [vmem:[#allocation11 + $0x2a0] sm:$0xff]
        %v1392 = vld [vmem:[#allocation11 + $0x2a8] sm:$0xff]
        %v1393 = vld [vmem:[#allocation11 + $0x2b0] sm:$0xff]
        %v1394 = vld [vmem:[#allocation11 + $0x2b8] sm:$0xff]
        %v1395 = vld [vmem:[#allocation11 + $0x2c0] sm:$0xff]
        %v1396 = vld [vmem:[#allocation11 + $0x2c8] sm:$0xff]
        %v1397 = vld [vmem:[#allocation11 + $0x2d0] sm:$0xff]
        %v1398 = vld [vmem:[#allocation11 + $0x2d8] sm:$0xff]
        %v1399 = vld [vmem:[#allocation11 + $0x2e0] sm:$0xff]
        %v1400 = vld [vmem:[#allocation11 + $0x2e8] sm:$0xff]
        %v1401 = vld [vmem:[#allocation11 + $0x2f0] sm:$0xff]
        %v1402 = vld [vmem:[#allocation11 + $0x2f8] sm:$0xff]
        %1403 = vmatprep.subr.mxu0 0.0
        %1404 = vmatpush1.msra.mxu0 %v1387
        %1405 = vmatprep.subr.mxu0 0.0
        %1406 = vmatpush1.msra.mxu0 %v1388
        %1407 = vmatprep.subr.mxu0 0.0
        %1408 = vmatpush1.msra.mxu0 %v1389
        %1409 = vmatprep.subr.mxu0 0.0
        %1410 = vmatpush1.msra.mxu0 %v1390
        %1411 = vmatprep.subr.mxu0 0.0
        %1412 = vmatpush1.msra.mxu0 %v1391
        %1413 = vmatprep.subr.mxu0 0.0
        %1414 = vmatpush1.msra.mxu0 %v1392
        %1415 = vmatprep.subr.mxu0 0.0
        %1416 = vmatpush1.msra.mxu0 %v1393
        %1417 = vmatprep.subr.mxu0 0.0
        %1418 = vmatpush1.msra.mxu0 %v1394
        %1419 = vmatprep.subr.mxu0 0.0
        %1420 = vmatpush1.msra.mxu0 %v1395
        %1421 = vmatprep.subr.mxu0 0.0
        %1422 = vmatpush1.msra.mxu0 %v1396
        %1423 = vmatprep.subr.mxu0 0.0
        %1424 = vmatpush1.msra.mxu0 %v1397
        %1425 = vmatprep.subr.mxu0 0.0
        %1426 = vmatpush1.msra.mxu0 %v1398
        %1427 = vmatprep.subr.mxu0 0.0
        %1428 = vmatpush1.msra.mxu0 %v1399
        %1429 = vmatprep.subr.mxu0 0.0
        %1430 = vmatpush1.msra.mxu0 %v1400
        %1431 = vmatprep.subr.mxu0 0.0
        %1432 = vmatpush1.msra.mxu0 %v1401
        %1433 = vmatprep.subr.mxu0 0.0
        %1434 = vmatpush1.msra.mxu0 %v1402
        %1435 = vmatprep.subr.mxu0 0.0
        %1436 = vmatpush1.msra.mxu0 0.0
        %1437 = vmatprep.subr.mxu0 0.0
        %1438 = vmatpush1.msra.mxu0 0.0
        %1439 = vmatprep.subr.mxu0 0.0
        %1440 = vmatpush1.msra.mxu0 0.0
        %1441 = vmatprep.subr.mxu0 0.0
        %1442 = vmatpush1.msra.mxu0 0.0
        %1443 = vmatprep.subr.mxu0 0.0
        %1444 = vmatpush1.msra.mxu0 0.0
        %1445 = vmatprep.subr.mxu0 0.0
        %1446 = vmatpush1.msra.mxu0 0.0
        %1447 = vmatprep.subr.mxu0 0.0
        %1448 = vmatpush1.msra.mxu0 0.0
        %1449 = vmatprep.subr.mxu0 0.0
        %1450 = vmatpush1.msra.mxu0 0.0
        %1451 = vmatprep.subr.mxu0 0.0
        %1452 = vmatpush1.msra.mxu0 0.0
        %1453 = vmatprep.subr.mxu0 0.0
        %1454 = vmatpush1.msra.mxu0 0.0
        %1455 = vmatprep.subr.mxu0 0.0
        %1456 = vmatpush1.msra.mxu0 0.0
        %1457 = vmatprep.subr.mxu0 0.0
        %1458 = vmatpush1.msra.mxu0 0.0
        %1459 = vmatprep.subr.mxu0 0.0
        %1460 = vmatpush1.msra.mxu0 0.0
        %1461 = vmatprep.subr.mxu0 0.0
        %1462 = vmatpush1.msra.mxu0 0.0
        %1463 = vmatprep.subr.mxu0 0.0
        %1464 = vmatpush1.msra.mxu0 0.0
        %1465 = vmatprep.subr.mxu0 0.0
        %1466 = vmatpush1.msra.mxu0 0.0
        %1467 = vmatprep.mubr.f32.mxu0 0.0
        %1468 = vmatmul.mubr.f32.gmra.mrb[0].mxu0 %v865
        %v1469 = vpop.f32.mrb[0].mxu0
        %v1470 = vadd.f32 0.0, %v1469
        %v1471 = vpop.f32.mrb[0].mxu0
        %1472 = vmatprep.mubr.f32.mxu0 0.0
        %1473 = vmatmul.mubr.f32.gmra.mrb[0].mxu0 %v866
        %v1474 = vpop.f32.mrb[0].mxu0
        %v1475 = vadd.f32 0.0, %v1474
        %v1476 = vpop.f32.mrb[0].mxu0
        %1477 = vmatprep.mubr.f32.mxu0 0.0
        %1478 = vmatmul.mubr.f32.gmra.mrb[0].mxu0 %v867
        %v1479 = vpop.f32.mrb[0].mxu0
        %v1480 = vadd.f32 0.0, %v1479
        %v1481 = vpop.f32.mrb[0].mxu0
        %1482 = vmatprep.mubr.f32.mxu0 0.0
        %1483 = vmatmul.mubr.f32.gmra.mrb[0].mxu0 %v868
        %v1484 = vpop.f32.mrb[0].mxu0
        %v1485 = vadd.f32 0.0, %v1484
        %v1486 = vpop.f32.mrb[0].mxu0
        %1487 = vdwg.mxu0
        %v1488 = vadd.f32 %v1383, %v1470
        %v1489 = vadd.f32 %v1384, %v1475
        %v1490 = vadd.f32 %v1385, %v1480
        %v1491 = vadd.f32 %v1386, %v1485
        %v1492 = vld [vmem:[#allocation11 + $0x300] sm:$0xff]
        %v1493 = vld [vmem:[#allocation11 + $0x308] sm:$0xff]
        %v1494 = vld [vmem:[#allocation11 + $0x310] sm:$0xff]
        %v1495 = vld [vmem:[#allocation11 + $0x318] sm:$0xff]
        %v1496 = vld [vmem:[#allocation11 + $0x320] sm:$0xff]
        %v1497 = vld [vmem:[#allocation11 + $0x328] sm:$0xff]
        %v1498 = vld [vmem:[#allocation11 + $0x330] sm:$0xff]
        %v1499 = vld [vmem:[#allocation11 + $0x338] sm:$0xff]
        %v1500 = vld [vmem:[#allocation11 + $0x340] sm:$0xff]
        %v1501 = vld [vmem:[#allocation11 + $0x348] sm:$0xff]
        %v1502 = vld [vmem:[#allocation11 + $0x350] sm:$0xff]
        %v1503 = vld [vmem:[#allocation11 + $0x358] sm:$0xff]
        %v1504 = vld [vmem:[#allocation11 + $0x360] sm:$0xff]
        %v1505 = vld [vmem:[#allocation11 + $0x368] sm:$0xff]
        %v1506 = vld [vmem:[#allocation11 + $0x370] sm:$0xff]
        %v1507 = vld [vmem:[#allocation11 + $0x378] sm:$0xff]
        %1508 = vmatprep.subr.mxu0 0.0
        %1509 = vmatpush1.msra.mxu0 %v1492
        %1510 = vmatprep.subr.mxu0 0.0
        %1511 = vmatpush1.msra.mxu0 %v1493
        %1512 = vmatprep.subr.mxu0 0.0
        %1513 = vmatpush1.msra.mxu0 %v1494
        %1514 = vmatprep.subr.mxu0 0.0
        %1515 = vmatpush1.msra.mxu0 %v1495
        %1516 = vmatprep.subr.mxu0 0.0
        %1517 = vmatpush1.msra.mxu0 %v1496
        %1518 = vmatprep.subr.mxu0 0.0
        %1519 = vmatpush1.msra.mxu0 %v1497
        %1520 = vmatprep.subr.mxu0 0.0
        %1521 = vmatpush1.msra.mxu0 %v1498
        %1522 = vmatprep.subr.mxu0 0.0
        %1523 = vmatpush1.msra.mxu0 %v1499
        %1524 = vmatprep.subr.mxu0 0.0
        %1525 = vmatpush1.msra.mxu0 %v1500
        %1526 = vmatprep.subr.mxu0 0.0
        %1527 = vmatpush1.msra.mxu0 %v1501
        %1528 = vmatprep.subr.mxu0 0.0
        %1529 = vmatpush1.msra.mxu0 %v1502
        %1530 = vmatprep.subr.mxu0 0.0
        %1531 = vmatpush1.msra.mxu0 %v1503
        %1532 = vmatprep.subr.mxu0 0.0
        %1533 = vmatpush1.msra.mxu0 %v1504
        %1534 = vmatprep.subr.mxu0 0.0
        %1535 = vmatpush1.msra.mxu0 %v1505
        %1536 = vmatprep.subr.mxu0 0.0
        %1537 = vmatpush1.msra.mxu0 %v1506
        %1538 = vmatprep.subr.mxu0 0.0
        %1539 = vmatpush1.msra.mxu0 %v1507
        %1540 = vmatprep.subr.mxu0 0.0
        %1541 = vmatpush1.msra.mxu0 0.0
        %1542 = vmatprep.subr.mxu0 0.0
        %1543 = vmatpush1.msra.mxu0 0.0
        %1544 = vmatprep.subr.mxu0 0.0
        %1545 = vmatpush1.msra.mxu0 0.0
        %1546 = vmatprep.subr.mxu0 0.0
        %1547 = vmatpush1.msra.mxu0 0.0
        %1548 = vmatprep.subr.mxu0 0.0
        %1549 = vmatpush1.msra.mxu0 0.0
        %1550 = vmatprep.subr.mxu0 0.0
        %1551 = vmatpush1.msra.mxu0 0.0
        %1552 = vmatprep.subr.mxu0 0.0
        %1553 = vmatpush1.msra.mxu0 0.0
        %1554 = vmatprep.subr.mxu0 0.0
        %1555 = vmatpush1.msra.mxu0 0.0
        %1556 = vmatprep.subr.mxu0 0.0
        %1557 = vmatpush1.msra.mxu0 0.0
        %1558 = vmatprep.subr.mxu0 0.0
        %1559 = vmatpush1.msra.mxu0 0.0
        %1560 = vmatprep.subr.mxu0 0.0
        %1561 = vmatpush1.msra.mxu0 0.0
        %1562 = vmatprep.subr.mxu0 0.0
        %1563 = vmatpush1.msra.mxu0 0.0
        %1564 = vmatprep.subr.mxu0 0.0
        %1565 = vmatpush1.msra.mxu0 0.0
        %1566 = vmatprep.subr.mxu0 0.0
        %1567 = vmatpush1.msra.mxu0 0.0
        %1568 = vmatprep.subr.mxu0 0.0
        %1569 = vmatpush1.msra.mxu0 0.0
        %1570 = vmatprep.subr.mxu0 0.0
        %1571 = vmatpush1.msra.mxu0 0.0
        %1572 = vmatprep.mubr.f32.mxu0 0.0
        %1573 = vmatmul.mubr.f32.gmra.mrb[0].mxu0 %v817
        %v1574 = vpop.f32.mrb[0].mxu0
        %v1575 = vadd.f32 0.0, %v1574
        %v1576 = vpop.f32.mrb[0].mxu0
        %1577 = vmatprep.mubr.f32.mxu0 0.0
        %1578 = vmatmul.mubr.f32.gmra.mrb[0].mxu0 %v818
        %v1579 = vpop.f32.mrb[0].mxu0
        %v1580 = vadd.f32 0.0, %v1579
        %v1581 = vpop.f32.mrb[0].mxu0
        %1582 = vmatprep.mubr.f32.mxu0 0.0
        %1583 = vmatmul.mubr.f32.gmra.mrb[0].mxu0 %v819
        %v1584 = vpop.f32.mrb[0].mxu0
        %v1585 = vadd.f32 0.0, %v1584
        %v1586 = vpop.f32.mrb[0].mxu0
        %1587 = vmatprep.mubr.f32.mxu0 0.0
        %1588 = vmatmul.mubr.f32.gmra.mrb[0].mxu0 %v820
        %v1589 = vpop.f32.mrb[0].mxu0
        %v1590 = vadd.f32 0.0, %v1589
        %v1591 = vpop.f32.mrb[0].mxu0
        %1592 = vdwg.mxu0
        %v1593 = vadd.f32 %v1488, %v1575
        %v1594 = vadd.f32 %v1489, %v1580
        %v1595 = vadd.f32 %v1490, %v1585
        %v1596 = vadd.f32 %v1491, %v1590
        %v1597 = vld [vmem:[#allocation11 + $0x380] sm:$0xff]
        %v1598 = vld [vmem:[#allocation11 + $0x388] sm:$0xff]
        %v1599 = vld [vmem:[#allocation11 + $0x390] sm:$0xff]
        %v1600 = vld [vmem:[#allocation11 + $0x398] sm:$0xff]
        %v1601 = vld [vmem:[#allocation11 + $0x3a0] sm:$0xff]
        %v1602 = vld [vmem:[#allocation11 + $0x3a8] sm:$0xff]
        %v1603 = vld [vmem:[#allocation11 + $0x3b0] sm:$0xff]
        %v1604 = vld [vmem:[#allocation11 + $0x3b8] sm:$0xff]
        %v1605 = vld [vmem:[#allocation11 + $0x3c0] sm:$0xff]
        %v1606 = vld [vmem:[#allocation11 + $0x3c8] sm:$0xff]
        %v1607 = vld [vmem:[#allocation11 + $0x3d0] sm:$0xff]
        %v1608 = vld [vmem:[#allocation11 + $0x3d8] sm:$0xff]
        %v1609 = vld [vmem:[#allocation11 + $0x3e0] sm:$0xff]
        %v1610 = vld [vmem:[#allocation11 + $0x3e8] sm:$0xff]
        %v1611 = vld [vmem:[#allocation11 + $0x3f0] sm:$0xff]
        %v1612 = vld [vmem:[#allocation11 + $0x3f8] sm:$0xff]
        %1613 = vmatprep.subr.mxu0 0.0
        %1614 = vmatpush1.msra.mxu0 %v1597
        %1615 = vmatprep.subr.mxu0 0.0
        %1616 = vmatpush1.msra.mxu0 %v1598
        %1617 = vmatprep.subr.mxu0 0.0
        %1618 = vmatpush1.msra.mxu0 %v1599
        %1619 = vmatprep.subr.mxu0 0.0
        %1620 = vmatpush1.msra.mxu0 %v1600
        %1621 = vmatprep.subr.mxu0 0.0
        %1622 = vmatpush1.msra.mxu0 %v1601
        %1623 = vmatprep.subr.mxu0 0.0
        %1624 = vmatpush1.msra.mxu0 %v1602
        %1625 = vmatprep.subr.mxu0 0.0
        %1626 = vmatpush1.msra.mxu0 %v1603
        %1627 = vmatprep.subr.mxu0 0.0
        %1628 = vmatpush1.msra.mxu0 %v1604
        %1629 = vmatprep.subr.mxu0 0.0
        %1630 = vmatpush1.msra.mxu0 %v1605
        %1631 = vmatprep.subr.mxu0 0.0
        %1632 = vmatpush1.msra.mxu0 %v1606
        %1633 = vmatprep.subr.mxu0 0.0
        %1634 = vmatpush1.msra.mxu0 %v1607
        %1635 = vmatprep.subr.mxu0 0.0
        %1636 = vmatpush1.msra.mxu0 %v1608
        %1637 = vmatprep.subr.mxu0 0.0
        %1638 = vmatpush1.msra.mxu0 %v1609
        %1639 = vmatprep.subr.mxu0 0.0
        %1640 = vmatpush1.msra.mxu0 %v1610
        %1641 = vmatprep.subr.mxu0 0.0
        %1642 = vmatpush1.msra.mxu0 %v1611
        %1643 = vmatprep.subr.mxu0 0.0
        %1644 = vmatpush1.msra.mxu0 %v1612
        %1645 = vmatprep.subr.mxu0 0.0
        %1646 = vmatpush1.msra.mxu0 0.0
        %1647 = vmatprep.subr.mxu0 0.0
        %1648 = vmatpush1.msra.mxu0 0.0
        %1649 = vmatprep.subr.mxu0 0.0
        %1650 = vmatpush1.msra.mxu0 0.0
        %1651 = vmatprep.subr.mxu0 0.0
        %1652 = vmatpush1.msra.mxu0 0.0
        %1653 = vmatprep.subr.mxu0 0.0
        %1654 = vmatpush1.msra.mxu0 0.0
        %1655 = vmatprep.subr.mxu0 0.0
        %1656 = vmatpush1.msra.mxu0 0.0
        %1657 = vmatprep.subr.mxu0 0.0
        %1658 = vmatpush1.msra.mxu0 0.0
        %1659 = vmatprep.subr.mxu0 0.0
        %1660 = vmatpush1.msra.mxu0 0.0
        %1661 = vmatprep.subr.mxu0 0.0
        %1662 = vmatpush1.msra.mxu0 0.0
        %1663 = vmatprep.subr.mxu0 0.0
        %1664 = vmatpush1.msra.mxu0 0.0
        %1665 = vmatprep.subr.mxu0 0.0
        %1666 = vmatpush1.msra.mxu0 0.0
        %1667 = vmatprep.subr.mxu0 0.0
        %1668 = vmatpush1.msra.mxu0 0.0
        %1669 = vmatprep.subr.mxu0 0.0
        %1670 = vmatpush1.msra.mxu0 0.0
        %1671 = vmatprep.subr.mxu0 0.0
        %1672 = vmatpush1.msra.mxu0 0.0
        %1673 = vmatprep.subr.mxu0 0.0
        %1674 = vmatpush1.msra.mxu0 0.0
        %1675 = vmatprep.subr.mxu0 0.0
        %1676 = vmatpush1.msra.mxu0 0.0
        %1677 = vmatprep.mubr.f32.mxu0 0.0
        %1678 = vmatmul.mubr.f32.gmra.mrb[0].mxu0 %v756
        %v1679 = vpop.f32.mrb[0].mxu0
        %v1680 = vadd.f32 0.0, %v1679
        %v1681 = vpop.f32.mrb[0].mxu0
        %1682 = vmatprep.mubr.f32.mxu0 0.0
        %1683 = vmatmul.mubr.f32.gmra.mrb[0].mxu0 %v757
        %v1684 = vpop.f32.mrb[0].mxu0
        %v1685 = vadd.f32 0.0, %v1684
        %v1686 = vpop.f32.mrb[0].mxu0
        %1687 = vmatprep.mubr.f32.mxu0 0.0
        %1688 = vmatmul.mubr.f32.gmra.mrb[0].mxu0 %v758
        %v1689 = vpop.f32.mrb[0].mxu0
        %v1690 = vadd.f32 0.0, %v1689
        %v1691 = vpop.f32.mrb[0].mxu0
        %1692 = vmatprep.mubr.f32.mxu0 0.0
        %1693 = vmatmul.mubr.f32.gmra.mrb[0].mxu0 %v759
        %v1694 = vpop.f32.mrb[0].mxu0
        %v1695 = vadd.f32 0.0, %v1694
        %v1696 = vpop.f32.mrb[0].mxu0
        %1697 = vdwg.mxu0
        %v1698 = vadd.f32 %v1593, %v1680
        %v1699 = vadd.f32 %v1594, %v1685
        %v1700 = vadd.f32 %v1595, %v1690
        %v1701 = vadd.f32 %v1596, %v1695
        %v1702 = vld [vmem:[#allocation11 + $0x400] sm:$0xff]
        %v1703 = vld [vmem:[#allocation11 + $0x408] sm:$0xff]
        %v1704 = vld [vmem:[#allocation11 + $0x410] sm:$0xff]
        %v1705 = vld [vmem:[#allocation11 + $0x418] sm:$0xff]
        %v1706 = vld [vmem:[#allocation11 + $0x420] sm:$0xff]
        %v1707 = vld [vmem:[#allocation11 + $0x428] sm:$0xff]
        %v1708 = vld [vmem:[#allocation11 + $0x430] sm:$0xff]
        %v1709 = vld [vmem:[#allocation11 + $0x438] sm:$0xff]
        %v1710 = vld [vmem:[#allocation11 + $0x440] sm:$0xff]
        %v1711 = vld [vmem:[#allocation11 + $0x448] sm:$0xff]
        %v1712 = vld [vmem:[#allocation11 + $0x450] sm:$0xff]
        %v1713 = vld [vmem:[#allocation11 + $0x458] sm:$0xff]
        %v1714 = vld [vmem:[#allocation11 + $0x460] sm:$0xff]
        %v1715 = vld [vmem:[#allocation11 + $0x468] sm:$0xff]
        %v1716 = vld [vmem:[#allocation11 + $0x470] sm:$0xff]
        %v1717 = vld [vmem:[#allocation11 + $0x478] sm:$0xff]
        %1718 = vmatprep.subr.mxu0 0.0
        %1719 = vmatpush1.msra.mxu0 %v1702
        %1720 = vmatprep.subr.mxu0 0.0
        %1721 = vmatpush1.msra.mxu0 %v1703
        %1722 = vmatprep.subr.mxu0 0.0
        %1723 = vmatpush1.msra.mxu0 %v1704
        %1724 = vmatprep.subr.mxu0 0.0
        %1725 = vmatpush1.msra.mxu0 %v1705
        %1726 = vmatprep.subr.mxu0 0.0
        %1727 = vmatpush1.msra.mxu0 %v1706
        %1728 = vmatprep.subr.mxu0 0.0
        %1729 = vmatpush1.msra.mxu0 %v1707
        %1730 = vmatprep.subr.mxu0 0.0
        %1731 = vmatpush1.msra.mxu0 %v1708
        %1732 = vmatprep.subr.mxu0 0.0
        %1733 = vmatpush1.msra.mxu0 %v1709
        %1734 = vmatprep.subr.mxu0 0.0
        %1735 = vmatpush1.msra.mxu0 %v1710
        %1736 = vmatprep.subr.mxu0 0.0
        %1737 = vmatpush1.msra.mxu0 %v1711
        %1738 = vmatprep.subr.mxu0 0.0
        %1739 = vmatpush1.msra.mxu0 %v1712
        %1740 = vmatprep.subr.mxu0 0.0
        %1741 = vmatpush1.msra.mxu0 %v1713
        %1742 = vmatprep.subr.mxu0 0.0
        %1743 = vmatpush1.msra.mxu0 %v1714
        %1744 = vmatprep.subr.mxu0 0.0
        %1745 = vmatpush1.msra.mxu0 %v1715
        %1746 = vmatprep.subr.mxu0 0.0
        %1747 = vmatpush1.msra.mxu0 %v1716
        %1748 = vmatprep.subr.mxu0 0.0
        %1749 = vmatpush1.msra.mxu0 %v1717
        %1750 = vmatprep.subr.mxu0 0.0
        %1751 = vmatpush1.msra.mxu0 0.0
        %1752 = vmatprep.subr.mxu0 0.0
        %1753 = vmatpush1.msra.mxu0 0.0
        %1754 = vmatprep.subr.mxu0 0.0
        %1755 = vmatpush1.msra.mxu0 0.0
        %1756 = vmatprep.subr.mxu0 0.0
        %1757 = vmatpush1.msra.mxu0 0.0
        %1758 = vmatprep.subr.mxu0 0.0
        %1759 = vmatpush1.msra.mxu0 0.0
        %1760 = vmatprep.subr.mxu0 0.0
        %1761 = vmatpush1.msra.mxu0 0.0
        %1762 = vmatprep.subr.mxu0 0.0
        %1763 = vmatpush1.msra.mxu0 0.0
        %1764 = vmatprep.subr.mxu0 0.0
        %1765 = vmatpush1.msra.mxu0 0.0
        %1766 = vmatprep.subr.mxu0 0.0
        %1767 = vmatpush1.msra.mxu0 0.0
        %1768 = vmatprep.subr.mxu0 0.0
        %1769 = vmatpush1.msra.mxu0 0.0
        %1770 = vmatprep.subr.mxu0 0.0
        %1771 = vmatpush1.msra.mxu0 0.0
        %1772 = vmatprep.subr.mxu0 0.0
        %1773 = vmatpush1.msra.mxu0 0.0
        %1774 = vmatprep.subr.mxu0 0.0
        %1775 = vmatpush1.msra.mxu0 0.0
        %1776 = vmatprep.subr.mxu0 0.0
        %1777 = vmatpush1.msra.mxu0 0.0
        %1778 = vmatprep.subr.mxu0 0.0
        %1779 = vmatpush1.msra.mxu0 0.0
        %1780 = vmatprep.subr.mxu0 0.0
        %1781 = vmatpush1.msra.mxu0 0.0
        %1782 = vmatprep.mubr.f32.mxu0 0.0
        %1783 = vmatmul.mubr.f32.gmra.mrb[0].mxu0 %v866
        %v1784 = vpop.f32.mrb[0].mxu0
        %v1785 = vadd.f32 0.0, %v1784
        %v1786 = vpop.f32.mrb[0].mxu0
        %1787 = vmatprep.mubr.f32.mxu0 0.0
        %1788 = vmatmul.mubr.f32.gmra.mrb[0].mxu0 %v867
        %v1789 = vpop.f32.mrb[0].mxu0
        %v1790 = vadd.f32 0.0, %v1789
        %v1791 = vpop.f32.mrb[0].mxu0
        %1792 = vmatprep.mubr.f32.mxu0 0.0
        %1793 = vmatmul.mubr.f32.gmra.mrb[0].mxu0 %v868
        %v1794 = vpop.f32.mrb[0].mxu0
        %v1795 = vadd.f32 0.0, %v1794
        %v1796 = vpop.f32.mrb[0].mxu0
        %1797 = vmatprep.mubr.f32.mxu0 0.0
        %1798 = vmatmul.mubr.f32.gmra.mrb[0].mxu0 %v869
        %v1799 = vpop.f32.mrb[0].mxu0
        %v1800 = vadd.f32 0.0, %v1799
        %v1801 = vpop.f32.mrb[0].mxu0
        %1802 = vdwg.mxu0
        %v1803 = vadd.f32 %v1698, %v1785
        %v1804 = vadd.f32 %v1699, %v1790
        %v1805 = vadd.f32 %v1700, %v1795
        %v1806 = vadd.f32 %v1701, %v1800
        %v1807 = vld [vmem:[#allocation13] sm:$0x1]
        %v1809 = vlaneseq
        %v1810 = vshrl.u32 %v1809, 7
        %v1811 = vsub.s32 0, %v1810
        %v1812 = vrot.slane %v1807, %v1811
        %v1814 = vadd.f32 %v1803, %v1812
        %v1815 = vadd.f32 %v1804, %v1812
        %v1816 = vadd.f32 %v1805, %v1812
        %v1817 = vadd.f32 %v1806, %v1812
        %v1818 = vmax.f32 %v1814, 0.0
        %v1819 = vmax.f32 %v1815, 0.0
        %v1820 = vmax.f32 %v1816, 0.0
        %v1821 = vmax.f32 %v1817, 0.0
        %v1822 = vld [vmem:[#allocation14] sm:$0xff]
        %v1823 = vld [vmem:[#allocation14 + $0x8] sm:$0xff]
        %v1824 = vld [vmem:[#allocation14 + $0x10] sm:$0xff]
        %v1825 = vld [vmem:[#allocation14 + $0x18] sm:$0xff]
        %v1826 = vld [vmem:[#allocation14 + $0x20] sm:$0xff]
        %v1827 = vld [vmem:[#allocation14 + $0x28] sm:$0xff]
        %v1828 = vld [vmem:[#allocation14 + $0x30] sm:$0xff]
        %v1829 = vld [vmem:[#allocation14 + $0x38] sm:$0xff]
        %v1830 = vld [vmem:[#allocation14 + $0x40] sm:$0xff]
        %v1831 = vld [vmem:[#allocation14 + $0x48] sm:$0xff]
        %v1832 = vld [vmem:[#allocation14 + $0x50] sm:$0xff]
        %v1833 = vld [vmem:[#allocation14 + $0x58] sm:$0xff]
        %v1834 = vld [vmem:[#allocation14 + $0x60] sm:$0xff]
        %v1835 = vld [vmem:[#allocation14 + $0x68] sm:$0xff]
        %v1836 = vld [vmem:[#allocation14 + $0x70] sm:$0xff]
        %v1837 = vld [vmem:[#allocation14 + $0x78] sm:$0xff]
        %v1838 = vld [vmem:[#allocation16] sm:$0x1]
        %v1840 = vlaneseq
        %v1841 = vshrl.u32 %v1840, 7
        %v1842 = vsub.s32 0, %v1841
        %v1843 = vrot.slane %v1838, %v1842
        %1845 = vmatprep.subr.mxu0 0.0
        %1846 = vmatpush1.msra.mxu0 %v1822
        %1847 = vmatprep.subr.mxu0 0.0
        %1848 = vmatpush1.msra.mxu0 %v1823
        %1849 = vmatprep.subr.mxu0 0.0
        %1850 = vmatpush1.msra.mxu0 %v1824
        %1851 = vmatprep.subr.mxu0 0.0
        %1852 = vmatpush1.msra.mxu0 %v1825
        %1853 = vmatprep.subr.mxu0 0.0
        %1854 = vmatpush1.msra.mxu0 %v1826
        %1855 = vmatprep.subr.mxu0 0.0
        %1856 = vmatpush1.msra.mxu0 %v1827
        %1857 = vmatprep.subr.mxu0 0.0
        %1858 = vmatpush1.msra.mxu0 %v1828
        %1859 = vmatprep.subr.mxu0 0.0
        %1860 = vmatpush1.msra.mxu0 %v1829
        %1861 = vmatprep.subr.mxu0 0.0
        %1862 = vmatpush1.msra.mxu0 %v1830
        %1863 = vmatprep.subr.mxu0 0.0
        %1864 = vmatpush1.msra.mxu0 %v1831
        %1865 = vmatprep.subr.mxu0 0.0
        %1866 = vmatpush1.msra.mxu0 %v1832
        %1867 = vmatprep.subr.mxu0 0.0
        %1868 = vmatpush1.msra.mxu0 %v1833
        %1869 = vmatprep.subr.mxu0 0.0
        %1870 = vmatpush1.msra.mxu0 %v1834
        %1871 = vmatprep.subr.mxu0 0.0
        %1872 = vmatpush1.msra.mxu0 %v1835
        %1873 = vmatprep.subr.mxu0 0.0
        %1874 = vmatpush1.msra.mxu0 %v1836
        %1875 = vmatprep.subr.mxu0 0.0
        %1876 = vmatpush1.msra.mxu0 %v1837
        %1877 = vmatprep.subr.mxu0 0.0
        %1878 = vmatpush1.msra.mxu0 0.0
        %1879 = vmatprep.subr.mxu0 0.0
        %1880 = vmatpush1.msra.mxu0 0.0
        %1881 = vmatprep.subr.mxu0 0.0
        %1882 = vmatpush1.msra.mxu0 0.0
        %1883 = vmatprep.subr.mxu0 0.0
        %1884 = vmatpush1.msra.mxu0 0.0
        %1885 = vmatprep.subr.mxu0 0.0
        %1886 = vmatpush1.msra.mxu0 0.0
        %1887 = vmatprep.subr.mxu0 0.0
        %1888 = vmatpush1.msra.mxu0 0.0
        %1889 = vmatprep.subr.mxu0 0.0
        %1890 = vmatpush1.msra.mxu0 0.0
        %1891 = vmatprep.subr.mxu0 0.0
        %1892 = vmatpush1.msra.mxu0 0.0
        %1893 = vmatprep.subr.mxu0 0.0
        %1894 = vmatpush1.msra.mxu0 0.0
        %1895 = vmatprep.subr.mxu0 0.0
        %1896 = vmatpush1.msra.mxu0 0.0
        %1897 = vmatprep.subr.mxu0 0.0
        %1898 = vmatpush1.msra.mxu0 0.0
        %1899 = vmatprep.subr.mxu0 0.0
        %1900 = vmatpush1.msra.mxu0 0.0
        %1901 = vmatprep.subr.mxu0 0.0
        %1902 = vmatpush1.msra.mxu0 0.0
        %1903 = vmatprep.subr.mxu0 0.0
        %1904 = vmatpush1.msra.mxu0 0.0
        %1905 = vmatprep.subr.mxu0 0.0
        %1906 = vmatpush1.msra.mxu0 0.0
        %1907 = vmatprep.subr.mxu0 0.0
        %1908 = vmatpush1.msra.mxu0 0.0
        %1909 = vmatprep.mubr.f32.mxu0 0.0
        %1910 = vmatmul.mubr.f32.gmra.mrb[0].mxu0 %v1818
        %v1911 = vpop.f32.mrb[0].mxu0
        %v1912 = vadd.f32 %v1843, %v1911
        %v1913 = vpop.f32.mrb[0].mxu0
        %1914 = vmatprep.mubr.f32.mxu0 0.0
        %1915 = vmatmul.mubr.f32.gmra.mrb[0].mxu0 %v1819
        %v1916 = vpop.f32.mrb[0].mxu0
        %v1917 = vadd.f32 %v1843, %v1916
        %v1918 = vpop.f32.mrb[0].mxu0
        %1919 = vmatprep.mubr.f32.mxu0 0.0
        %1920 = vmatmul.mubr.f32.gmra.mrb[0].mxu0 %v1820
        %v1921 = vpop.f32.mrb[0].mxu0
        %v1922 = vadd.f32 %v1843, %v1921
        %v1923 = vpop.f32.mrb[0].mxu0
        %1924 = vmatprep.mubr.f32.mxu0 0.0
        %1925 = vmatmul.mubr.f32.gmra.mrb[0].mxu0 %v1821
        %v1926 = vpop.f32.mrb[0].mxu0
        %v1927 = vadd.f32 %v1843, %v1926
        %v1928 = vpop.f32.mrb[0].mxu0
        %1929 = vdwg.mxu0
        %v1930 = vadd.f32 %v1912, %v629
        %v1931 = vadd.f32 %v1917, %v635
        %v1932 = vadd.f32 %v1922, %v641
        %v1933 = vadd.f32 %v1927, %v647
        %1934 = vst [vmem:[%s472] sm:$0xff] %v1930
        %1935 = vst [vmem:[%s472 + $0x8] sm:$0xff] %v1931
        %1936 = vst [vmem:[%s472 + $0x10] sm:$0xff] %v1932
        %1937 = vst [vmem:[%s472 + $0x18] sm:$0xff] %v1933
        %s1938 = sand.u32 %s246, 1
        %s1939 = scalar_lea.sflag [#allocation4], %s1938
        %s1940 = sand.u32 %s246, 1
        %s1941 = smul.addr %s1940, 32
        %s1942 = scalar_lea.vmem [#allocation17], %s1941
        // Predicated region
        $region93: #{bottleneck_v2_forward.1} parent=55 // pred_check
          %p1943 = pneg %p256
        $region94: #{bottleneck_v2_forward.1} parent=55 // pred_check_branch
          %1945 = sbr.rel (%p1943) target = $region96
        $region95: #{bottleneck_v2_forward.1} parent=55 // pred_region
          %s1946 = smul.u32 4, %s35
          %s1948 = ssub.s32 512, 512
          %1949 = vsyncadd %s1939, %s1948
          %s1950 = smul.addr %s34, 8
          %s1951 = sadd.s32 %s1946, %s1950
          %s1952 = smul.addr %s1951, 128
          %s1953 = scalar_lea.hbm %s9, %s1952
          %s1954 = sshll.u32 %s1942, 4
          %s1955 = int_to_ptr.vmem [resolvable:$true] %s1954
          %1960 = dma.vmem_to_hbm [thread:$0]  %s1955, 512, %s1953, %s1939, 128, 128, 8
        $region96: #{bottleneck_v2_forward.1} parent=55 // pred_fallthru
          _
      $region56: #{bottleneck_v2_forward.1} parent=5 // pred_fallthru
        _
      %p1961 = scmp.le.s32.totalorder 2, %s25
      // Predicated region
      $region97: #{bottleneck_v2_forward.1} parent=5 // pred_check
        %p1962 = pneg %p1961
      $region98: #{bottleneck_v2_forward.1} parent=5 // pred_check_branch
        %1964 = sbr.rel (%p1962) target = $region100
      $region99: #{bottleneck_v2_forward.1} parent=5 // pred_region
        %s1965 = ssub.s32 %s25, 2
        // Predicated region
        $region101: #{bottleneck_v2_forward.1} parent=99 // pred_check
          %p1966 = pneg %p262
        $region102: #{bottleneck_v2_forward.1} parent=99 // pred_check_branch
          %1968 = sbr.rel (%p1966) target = $region104
        $region103: #{bottleneck_v2_forward.1} parent=99 // pred_region
          %s1969 = sand.u32 %s247, 1
          %s1970 = scalar_lea.sflag [#allocation4], %s1969
          %s1971 = sand.u32 %s247, 1
          %s1972 = smul.addr %s1971, 32
          %s1973 = scalar_lea.vmem [#allocation17], %s1972
          %1974 = dma.done %s1970, 512
        $region104: #{bottleneck_v2_forward.1} parent=99 // pred_fallthru
          _
      $region100: #{bottleneck_v2_forward.1} parent=5 // pred_fallthru
        _
    $region6: #{bottleneck_v2_forward.1} parent=1 // loop_footer
      %s29 = sadd.s32 1, %s25
    $region7: #{bottleneck_v2_forward.1} parent=1 // loop_footer_branch
      %24 = sbr.rel target = $region3
    $region8: #{bottleneck_v2_forward.1} parent=1 // loop_exit
      _
    %1975 = vsyncpa [#allocation3], 1
    %s1976 = scalar_lea.sflag [#allocation3], 1
    %1977 = vsyncpa %s1976, 1
    %1978 = vsyncpa [#allocation6], 1
    %1979 = vsyncpa [#allocation9], 1
    %1980 = vsyncpa [#allocation12], 1
    %1981 = vsyncpa [#allocation15], 1
    %1982 = vsyncpa [#allocation4], 1
    %s1983 = scalar_lea.sflag [#allocation4], 1
    %1984 = vsyncpa %s1983, 1

</llo_original>
